<compile_context>
chip_gen: v5e
topology: v5e:2x2
jax: 0.10.0
libtpu: 0.0.40
codegen_flags: <defaults>
</compile_context>

<pallas_src>
import math

import jax
import jax.numpy as jnp
from jax.experimental import pallas as pl
from jax.experimental.pallas import tpu as pltpu


def _gelu_exact(v):
    # Matches torch.nn.GELU() default (erf-based, not tanh approximation).
    return 0.5 * v * (1.0 + jax.lax.erf(v * (1.0 / math.sqrt(2.0))))


def modular_graph_kernel(a_ref, x_ref, w1_ref, b1_ref, w2_ref, b2_ref,
                         pool_ref, wc_ref, bc_ref, out_ref):
    a = a_ref[...]                                                     # [Np, Np]
    x = x_ref[...]                                                     # [Np, Fp]

    # --- GCN layer 1 (reassociated: (A @ X) @ W1 since F_in < HIDDEN) ----------
    ax = jnp.dot(a, x, preferred_element_type=jnp.float32)             # [Np, Fp]
    h = jnp.dot(ax, w1_ref[...], preferred_element_type=jnp.float32) + b1_ref[...]
    h = _gelu_exact(h)                                                 # [Np, Hp]

    # --- GCN layer 2: A @ (H @ W2) + b2, then GELU (square, keep association) --
    hw = jnp.dot(h, w2_ref[...], preferred_element_type=jnp.float32)   # [Np, Hp]
    h = jnp.dot(a, hw, preferred_element_type=jnp.float32) + b2_ref[...]
    h = _gelu_exact(h)

    # --- global mean pool (normalized one-hot as a matmul) ---------------------
    g = jnp.dot(pool_ref[...], h, preferred_element_type=jnp.float32)  # [Bp, Hp]

    # --- classifier (lane-dense padded output) ---------------------------------
    out = jnp.dot(g, wc_ref[...], preferred_element_type=jnp.float32) + bc_ref[...]
    out_ref[...] = out.astype(out_ref.dtype)                           # [Bp, Cp]


def _pad_to(arr, target_shape):
    pads = [(0, t - s) for s, t in zip(arr.shape, target_shape)]
    return jnp.pad(arr, pads)


def _round_up(v, m):
    return ((v + m - 1) // m) * m


def modular_graph_forward(a_hat, x, w1, b1, w2, b2, pool_mat, wc, bc):
    N, F_in = x.shape
    H = w1.shape[1]
    B = pool_mat.shape[0]
    C = wc.shape[1]

    LANE, SUBLANE = 128, 8
    Np = _round_up(N, LANE)      # N sits on the lane axis of a_hat / pool_mat
    Fp = _round_up(F_in, LANE)
    Hp = _round_up(H, LANE)
    Cp = _round_up(C, LANE)
    Bp = _round_up(B, SUBLANE)

    # Zero padding is exact for this network (see header comment).
    a_p = _pad_to(a_hat, (Np, Np))
    x_p = _pad_to(x, (Np, Fp))
    w1_p = _pad_to(w1, (Fp, Hp))
    b1_p = _pad_to(b1, (1, Hp))
    w2_p = _pad_to(w2, (Hp, Hp))
    b2_p = _pad_to(b2, (1, Hp))
    pool_p = _pad_to(pool_mat, (Bp, Np))
    wc_p = _pad_to(wc, (Hp, Cp))
    bc_p = _pad_to(bc, (1, Cp))

    flops = 2 * (Np * Np * Fp + Np * Fp * Hp + Np * Hp * Hp + Np * Np * Hp
                 + Bp * Np * Hp + Bp * Hp * Cp)
    bytes_accessed = 4 * (a_p.size + x_p.size + w1_p.size + b1_p.size + w2_p.size
                          + b2_p.size + pool_p.size + wc_p.size + bc_p.size + Bp * Cp)

    vmem = pl.BlockSpec(memory_space=pltpu.MemorySpace.VMEM)
    out_p = pl.pallas_call(
        modular_graph_kernel,
        out_shape=jax.ShapeDtypeStruct((Bp, Cp), jnp.float32),
        in_specs=[vmem] * 9,
        out_specs=vmem,
        cost_estimate=pl.CostEstimate(flops=int(flops),
                                      transcendentals=int(2 * Np * Hp),
                                      bytes_accessed=int(bytes_accessed)),
    )(a_p, x_p, w1_p, b1_p, w2_p, b2_p, pool_p, wc_p, bc_p)

    # Strip padding back to the logical [num_graphs, num_classes] output.
    return out_p[:B, :C]


# ------------------------- glue (plain JAX, not hot path) ------------------------

def build_normalized_adjacency(edge_index, num_nodes):
    """GCN normalization: A_hat = D^-1/2 (A + I) D^-1/2 (symmetric, with self loops)."""
    src, dst = edge_index[0], edge_index[1]
    adj = jnp.zeros((num_nodes, num_nodes), jnp.float32).at[dst, src].set(1.0)
    adj = adj + jnp.eye(num_nodes, dtype=jnp.float32)          # add self loops
    deg = jnp.sum(adj, axis=1)
    dinv = jnp.where(deg > 0, 1.0 / jnp.sqrt(deg), 0.0)
    return dinv[:, None] * adj * dinv[None, :]


def build_mean_pool_matrix(batch, num_graphs):
    """P[b, n] = 1/|graph b| if node n belongs to graph b (global_mean_pool)."""
    onehot = (batch[None, :] == jnp.arange(num_graphs)[:, None]).astype(jnp.float32)
    counts = jnp.maximum(jnp.sum(onehot, axis=1, keepdims=True), 1.0)
    return onehot / counts


def jax_reference(a_hat, x, w1, b1, w2, b2, pool_mat, wc, bc):
    h = _gelu_exact(a_hat @ (x @ w1) + b1)
    h = _gelu_exact(a_hat @ (h @ w2) + b2)
    g = pool_mat @ h
    return g @ wc + bc


if __name__ == "__main__":
    # Small synthetic graph batch: 2 graphs of 8 nodes each (16 nodes total),
    # ring topology inside each graph.
    N_PER_GRAPH, NUM_GRAPHS = 8, 2
    N = N_PER_GRAPH * NUM_GRAPHS
    F_IN, HIDDEN, NUM_CLASSES = 8, 32, 4

    key = jax.random.PRNGKey(0)
    k_x, k_w1, k_b1, k_w2, k_b2, k_wc, k_bc = jax.random.split(key, 7)

    # node features
    x = jax.random.normal(k_x, (N, F_IN), dtype=jnp.float32)

    # edge_index: bidirectional ring within each graph
    src_list, dst_list = [], []
    for g in range(NUM_GRAPHS):
        base = g * N_PER_GRAPH
        for i in range(N_PER_GRAPH):
            a, b = base + i, base + (i + 1) % N_PER_GRAPH
            src_list += [a, b]
            dst_list += [b, a]
    edge_index = jnp.array([src_list, dst_list], dtype=jnp.int32)      # [2, 32]

    # batch assignment (node -> graph id)
    batch = jnp.repeat(jnp.arange(NUM_GRAPHS, dtype=jnp.int32), N_PER_GRAPH)

    # deterministic parameter init (synthetic; shapes follow GCNConv / Linear)
    w1 = jax.random.normal(k_w1, (F_IN, HIDDEN), jnp.float32) * 0.1
    b1 = jax.random.normal(k_b1, (1, HIDDEN), jnp.float32) * 0.01
    w2 = jax.random.normal(k_w2, (HIDDEN, HIDDEN), jnp.float32) * 0.1
    b2 = jax.random.normal(k_b2, (1, HIDDEN), jnp.float32) * 0.01
    wc = jax.random.normal(k_wc, (HIDDEN, NUM_CLASSES), jnp.float32) * 0.1
    bc = jax.random.normal(k_bc, (1, NUM_CLASSES), jnp.float32) * 0.01
    # TODO(synk): use_batchnorm=True (BatchNorm1d) and pool_type='learned'/'max'/'sum'
    #             branches are not exercised in this instantiation (defaults: gelu/mean/no-BN).

    a_hat = build_normalized_adjacency(edge_index, N)
    pool_mat = build_mean_pool_matrix(batch, NUM_GRAPHS)

    out = modular_graph_forward(a_hat, x, w1, b1, w2, b2, pool_mat, wc, bc)
    out = jax.block_until_ready(out)

    ref = jax_reference(a_hat, x, w1, b1, w2, b2, pool_mat, wc, bc)
    assert out.shape == (NUM_GRAPHS, NUM_CLASSES)
    assert jnp.allclose(out, ref, atol=1e-4, rtol=1e-4), "Pallas output mismatch"

    print("KERNEL_OK")
</pallas_src>

<mosaic_0001>
module attributes {stable_mosaic.version = 11 : i64} {
  func.func @modular_graph_kernel(%arg0: memref<128x128xf32, #tpu.memory_space<vmem>>, %arg1: memref<128x128xf32, #tpu.memory_space<vmem>>, %arg2: memref<128x128xf32, #tpu.memory_space<vmem>>, %arg3: memref<1x128xf32, #tpu.memory_space<vmem>>, %arg4: memref<128x128xf32, #tpu.memory_space<vmem>>, %arg5: memref<1x128xf32, #tpu.memory_space<vmem>>, %arg6: memref<8x128xf32, #tpu.memory_space<vmem>>, %arg7: memref<128x128xf32, #tpu.memory_space<vmem>>, %arg8: memref<1x128xf32, #tpu.memory_space<vmem>>, %arg9: memref<8x128xf32, #tpu.memory_space<vmem>>) attributes {dimension_semantics = [], scalar_prefetch = 0 : i64, scratch_operands = 0 : i64, tpu.core_type = #tpu.core_type<tc>} {
    %c0 = arith.constant 0 : index
    %c0_0 = arith.constant 0 : index
    %0 = vector.load %arg0[%c0, %c0_0] : memref<128x128xf32, #tpu.memory_space<vmem>>, vector<128x128xf32>
    %c0_1 = arith.constant 0 : index
    %c0_2 = arith.constant 0 : index
    %1 = vector.load %arg1[%c0_1, %c0_2] : memref<128x128xf32, #tpu.memory_space<vmem>>, vector<128x128xf32>
    %cst = arith.constant dense<0.000000e+00> : vector<128x128xf32>
    %2 = tpu.matmul %0, %1, %cst {dimension_numbers = #tpu.dot_dimension_numbers<[1], [0], [0], [1], [0, 0, 1, 1], [], []>} : vector<128x128xf32>, vector<128x128xf32>, vector<128x128xf32> -> vector<128x128xf32>
    %c0_3 = arith.constant 0 : index
    %c0_4 = arith.constant 0 : index
    %3 = vector.load %arg2[%c0_3, %c0_4] : memref<128x128xf32, #tpu.memory_space<vmem>>, vector<128x128xf32>
    %cst_5 = arith.constant dense<0.000000e+00> : vector<128x128xf32>
    %4 = tpu.matmul %2, %3, %cst_5 {dimension_numbers = #tpu.dot_dimension_numbers<[1], [0], [0], [1], [0, 0, 1, 1], [], []>} : vector<128x128xf32>, vector<128x128xf32>, vector<128x128xf32> -> vector<128x128xf32>
    %c0_6 = arith.constant 0 : index
    %c0_7 = arith.constant 0 : index
    %5 = vector.load %arg3[%c0_6, %c0_7] : memref<1x128xf32, #tpu.memory_space<vmem>>, vector<1x128xf32>
    %6 = vector.broadcast %5 : vector<1x128xf32> to vector<128x128xf32>
    %7 = arith.addf %4, %6 : vector<128x128xf32>
    %cst_8 = arith.constant 5.000000e-01 : f32
    %8 = vector.broadcast %cst_8 : f32 to vector<128x128xf32>
    %9 = arith.mulf %8, %7 : vector<128x128xf32>
    %cst_9 = arith.constant 0.707106769 : f32
    %10 = vector.broadcast %cst_9 : f32 to vector<128x128xf32>
    %11 = arith.mulf %7, %10 : vector<128x128xf32>
    %12 = math.erf %11 : vector<128x128xf32>
    %cst_10 = arith.constant 1.000000e+00 : f32
    %13 = vector.broadcast %cst_10 : f32 to vector<128x128xf32>
    %14 = arith.addf %13, %12 : vector<128x128xf32>
    %15 = arith.mulf %9, %14 : vector<128x128xf32>
    %c0_11 = arith.constant 0 : index
    %c0_12 = arith.constant 0 : index
    %16 = vector.load %arg4[%c0_11, %c0_12] : memref<128x128xf32, #tpu.memory_space<vmem>>, vector<128x128xf32>
    %cst_13 = arith.constant dense<0.000000e+00> : vector<128x128xf32>
    %17 = tpu.matmul %15, %16, %cst_13 {dimension_numbers = #tpu.dot_dimension_numbers<[1], [0], [0], [1], [0, 0, 1, 1], [], []>} : vector<128x128xf32>, vector<128x128xf32>, vector<128x128xf32> -> vector<128x128xf32>
    %cst_14 = arith.constant dense<0.000000e+00> : vector<128x128xf32>
    %18 = tpu.matmul %0, %17, %cst_14 {dimension_numbers = #tpu.dot_dimension_numbers<[1], [0], [0], [1], [0, 0, 1, 1], [], []>} : vector<128x128xf32>, vector<128x128xf32>, vector<128x128xf32> -> vector<128x128xf32>
    %c0_15 = arith.constant 0 : index
    %c0_16 = arith.constant 0 : index
    %19 = vector.load %arg5[%c0_15, %c0_16] : memref<1x128xf32, #tpu.memory_space<vmem>>, vector<1x128xf32>
    %20 = vector.broadcast %19 : vector<1x128xf32> to vector<128x128xf32>
    %21 = arith.addf %18, %20 : vector<128x128xf32>
    %cst_17 = arith.constant 5.000000e-01 : f32
    %22 = vector.broadcast %cst_17 : f32 to vector<128x128xf32>
    %23 = arith.mulf %22, %21 : vector<128x128xf32>
    %cst_18 = arith.constant 0.707106769 : f32
    %24 = vector.broadcast %cst_18 : f32 to vector<128x128xf32>
    %25 = arith.mulf %21, %24 : vector<128x128xf32>
    %26 = math.erf %25 : vector<128x128xf32>
    %cst_19 = arith.constant 1.000000e+00 : f32
    %27 = vector.broadcast %cst_19 : f32 to vector<128x128xf32>
    %28 = arith.addf %27, %26 : vector<128x128xf32>
    %29 = arith.mulf %23, %28 : vector<128x128xf32>
    %c0_20 = arith.constant 0 : index
    %c0_21 = arith.constant 0 : index
    %30 = vector.load %arg6[%c0_20, %c0_21] : memref<8x128xf32, #tpu.memory_space<vmem>>, vector<8x128xf32>
    %cst_22 = arith.constant dense<0.000000e+00> : vector<8x128xf32>
    %31 = tpu.matmul %30, %29, %cst_22 {dimension_numbers = #tpu.dot_dimension_numbers<[1], [0], [0], [1], [0, 0, 1, 1], [], []>} : vector<8x128xf32>, vector<128x128xf32>, vector<8x128xf32> -> vector<8x128xf32>
    %c0_23 = arith.constant 0 : index
    %c0_24 = arith.constant 0 : index
    %32 = vector.load %arg7[%c0_23, %c0_24] : memref<128x128xf32, #tpu.memory_space<vmem>>, vector<128x128xf32>
    %cst_25 = arith.constant dense<0.000000e+00> : vector<8x128xf32>
    %33 = tpu.matmul %31, %32, %cst_25 {dimension_numbers = #tpu.dot_dimension_numbers<[1], [0], [0], [1], [0, 0, 1, 1], [], []>} : vector<8x128xf32>, vector<128x128xf32>, vector<8x128xf32> -> vector<8x128xf32>
    %c0_26 = arith.constant 0 : index
    %c0_27 = arith.constant 0 : index
    %34 = vector.load %arg8[%c0_26, %c0_27] : memref<1x128xf32, #tpu.memory_space<vmem>>, vector<1x128xf32>
    %35 = vector.broadcast %34 : vector<1x128xf32> to vector<8x128xf32>
    %36 = arith.addf %33, %35 : vector<8x128xf32>
    %c0_28 = arith.constant 0 : index
    %c0_29 = arith.constant 0 : index
    %37 = vector.load %arg9[%c0_28, %c0_29] : memref<8x128xf32, #tpu.memory_space<vmem>>, vector<8x128xf32>
    tpu.vector_store %arg9[%c0_28, %c0_29], %36 {strides = array<i32>} : memref<8x128xf32, #tpu.memory_space<vmem>>, vector<8x128xf32>,
    return
  }
}

</mosaic_0001>

<llo_original>
// kernel: tpu_custom_call.1
$region0: #{tpu_custom_call.1}
  #allocation0 [shape = 'u32[]', space=smem, size = 0x4, offset = 0x4, fixed_abs, tag = 'smem constant byte address 0x4 - core index']
  #allocation1 [shape = 'u32[72,128]{1,0:T(1,128)}', space=vmem, size = 0x9000, scoped, tag = 'internal scratch']
  %s0 = inlined_call_operand.hbm [shape: f32[128,128], index: 0, kind: input, shape index: {}]
  %s1 = inlined_call_operand.hbm [shape: f32[128,128], index: 1, kind: input, shape index: {}]
  %s2 = inlined_call_operand.hbm [shape: f32[128,128], index: 2, kind: input, shape index: {}]
  %s3 = inlined_call_operand.vmem [shape: f32[1,128], index: 3, kind: input, shape index: {}]
  %s4 = inlined_call_operand.hbm [shape: f32[128,128], index: 4, kind: input, shape index: {}]
  %s5 = inlined_call_operand.vmem [shape: f32[1,128], index: 5, kind: input, shape index: {}]
  %s6 = inlined_call_operand.hbm [shape: f32[8,128], index: 6, kind: input, shape index: {}]
  %s7 = inlined_call_operand.hbm [shape: f32[128,128], index: 7, kind: input, shape index: {}]
  %s8 = inlined_call_operand.vmem [shape: f32[1,128], index: 8, kind: input, shape index: {}]
  %s9 = inlined_call_operand.hbm [shape: f32[8,128], index: 9, kind: output, shape index: {}]
  %s10 = sld [smem:[#allocation0]]
  $region70: #{tpu_custom_call.1} parent=0
    _
  %s12 = ssub.s32 1, %s10
  %s13 = scalar_select 0, %s12, %s10
  $region1: #{tpu_custom_call.1} parent=0
    #allocation2 [shape = 'u8[65536]{0}', space=vmem, size = 0x10000, scoped, tag = 'input window, operand 0, single buffered']
    #allocation3 [shape = 's32[1]{0}', space=sflag, size = 0x4, scoped, tag = 'scoped memory for tpu_custom_call.1']
    #allocation4 [shape = 's32[1]{0}', space=sflag, size = 0x4, scoped, tag = 'scoped memory for tpu_custom_call.1']
    #allocation5 [shape = 'u8[65536]{0}', space=vmem, size = 0x10000, scoped, tag = 'input window, operand 1, single buffered']
    #allocation6 [shape = 's32[1]{0}', space=sflag, size = 0x4, scoped, tag = 'scoped memory for tpu_custom_call.1']
    #allocation7 [shape = 'u8[65536]{0}', space=vmem, size = 0x10000, scoped, tag = 'input window, operand 2, single buffered']
    #allocation8 [shape = 'u8[65536]{0}', space=vmem, size = 0x10000, scoped, tag = 'input window, operand 4, single buffered']
    #allocation9 [shape = 's32[1]{0}', space=sflag, size = 0x4, scoped, tag = 'scoped memory for tpu_custom_call.1']
    #allocation10 [shape = 'u8[4096]{0}', space=vmem, size = 0x1000, scoped, tag = 'input window, operand 6, single buffered']
    #allocation11 [shape = 'u8[65536]{0}', space=vmem, size = 0x10000, scoped, tag = 'input window, operand 7, single buffered']
    #allocation12 [shape = 's32[1]{0}', space=sflag, size = 0x4, scoped, tag = 'scoped memory for tpu_custom_call.1']
    #allocation13 [shape = 'u8[4096]{0}', space=vmem, size = 0x1000, scoped, tag = 'output window, operand 0, single buffered']
    %14 = vsyncpa [#allocation3], 0
    %15 = vsyncpa [#allocation6], 0
    %16 = vsyncpa [#allocation9], 0
    %17 = vsyncpa [#allocation12], 0
    %18 = vsyncpa [#allocation4], 0
    // Predicated region
    $region2: #{tpu_custom_call.1} parent=1 // pred_check
      _
    $region3: #{tpu_custom_call.1} parent=1 // pred_check_branch
      %20 = sbr.rel (0) target = $region5
    $region4: #{tpu_custom_call.1} parent=1 // pred_region
      %22 = vsyncadd [#allocation3], 0
      %s23 = sshll.u32 %s0, 4
      %s24 = int_to_ptr.hbm [resolvable:$true] %s23
      %s25 = sshll.u32 [#allocation2], 4
      %s26 = int_to_ptr.vmem [resolvable:$true] %s25
      %31 = dma.hbm_to_vmem [thread:$0]  %s24, 2048, %s26, [#allocation3], 128, 128, 8
    $region5: #{tpu_custom_call.1} parent=1 // pred_fallthru
      _
    // Predicated region
    $region6: #{tpu_custom_call.1} parent=1 // pred_check
      _
    $region7: #{tpu_custom_call.1} parent=1 // pred_check_branch
      %33 = sbr.rel (0) target = $region9
    $region8: #{tpu_custom_call.1} parent=1 // pred_region
      %35 = vsyncadd [#allocation6], 0
      %s36 = sshll.u32 %s1, 4
      %s37 = int_to_ptr.hbm [resolvable:$true] %s36
      %s38 = sshll.u32 [#allocation5], 4
      %s39 = int_to_ptr.vmem [resolvable:$true] %s38
      %44 = dma.hbm_to_vmem [thread:$0]  %s37, 2048, %s39, [#allocation6], 128, 128, 8
    $region9: #{tpu_custom_call.1} parent=1 // pred_fallthru
      _
    // Predicated region
    $region10: #{tpu_custom_call.1} parent=1 // pred_check
      _
    $region11: #{tpu_custom_call.1} parent=1 // pred_check_branch
      %46 = sbr.rel (0) target = $region13
    $region12: #{tpu_custom_call.1} parent=1 // pred_region
      %48 = vsyncadd [#allocation6], 0
      %s49 = sshll.u32 %s2, 4
      %s50 = int_to_ptr.hbm [resolvable:$true] %s49
      %s51 = sshll.u32 [#allocation7], 4
      %s52 = int_to_ptr.vmem [resolvable:$true] %s51
      %57 = dma.hbm_to_vmem [thread:$0]  %s50, 2048, %s52, [#allocation6], 128, 128, 8
    $region13: #{tpu_custom_call.1} parent=1 // pred_fallthru
      _
    // Predicated region
    $region14: #{tpu_custom_call.1} parent=1 // pred_check
      _
    $region15: #{tpu_custom_call.1} parent=1 // pred_check_branch
      %59 = sbr.rel (0) target = $region17
    $region16: #{tpu_custom_call.1} parent=1 // pred_region
      _
    $region17: #{tpu_custom_call.1} parent=1 // pred_fallthru
      _
    // Predicated region
    $region18: #{tpu_custom_call.1} parent=1 // pred_check
      _
    $region19: #{tpu_custom_call.1} parent=1 // pred_check_branch
      %61 = sbr.rel (0) target = $region21
    $region20: #{tpu_custom_call.1} parent=1 // pred_region
      %63 = vsyncadd [#allocation9], 0
      %s64 = sshll.u32 %s4, 4
      %s65 = int_to_ptr.hbm [resolvable:$true] %s64
      %s66 = sshll.u32 [#allocation8], 4
      %s67 = int_to_ptr.vmem [resolvable:$true] %s66
      %72 = dma.hbm_to_vmem [thread:$0]  %s65, 2048, %s67, [#allocation9], 128, 128, 8
    $region21: #{tpu_custom_call.1} parent=1 // pred_fallthru
      _
    // Predicated region
    $region22: #{tpu_custom_call.1} parent=1 // pred_check
      _
    $region23: #{tpu_custom_call.1} parent=1 // pred_check_branch
      %74 = sbr.rel (0) target = $region25
    $region24: #{tpu_custom_call.1} parent=1 // pred_region
      _
    $region25: #{tpu_custom_call.1} parent=1 // pred_fallthru
      _
    // Predicated region
    $region26: #{tpu_custom_call.1} parent=1 // pred_check
      _
    $region27: #{tpu_custom_call.1} parent=1 // pred_check_branch
      %76 = sbr.rel (0) target = $region29
    $region28: #{tpu_custom_call.1} parent=1 // pred_region
      %78 = vsyncadd [#allocation9], 0
      %s80 = sshll.u32 %s6, 4
      %s81 = int_to_ptr.hbm [resolvable:$true] %s80
      %s82 = sshll.u32 [#allocation10], 4
      %s83 = int_to_ptr.vmem [resolvable:$true] %s82
      %85 = dma.hbm_to_vmem [thread:$0]  %s81, 128, %s83, [#allocation9]
    $region29: #{tpu_custom_call.1} parent=1 // pred_fallthru
      _
    // Predicated region
    $region30: #{tpu_custom_call.1} parent=1 // pred_check
      _
    $region31: #{tpu_custom_call.1} parent=1 // pred_check_branch
      %87 = sbr.rel (0) target = $region33
    $region32: #{tpu_custom_call.1} parent=1 // pred_region
      %89 = vsyncadd [#allocation12], 0
      %s90 = sshll.u32 %s7, 4
      %s91 = int_to_ptr.hbm [resolvable:$true] %s90
      %s92 = sshll.u32 [#allocation11], 4
      %s93 = int_to_ptr.vmem [resolvable:$true] %s92
      %98 = dma.hbm_to_vmem [thread:$0]  %s91, 2048, %s93, [#allocation12], 128, 128, 8
    $region33: #{tpu_custom_call.1} parent=1 // pred_fallthru
      _
    // Predicated region
    $region34: #{tpu_custom_call.1} parent=1 // pred_check
      _
    $region35: #{tpu_custom_call.1} parent=1 // pred_check_branch
      %100 = sbr.rel (0) target = $region37
    $region36: #{tpu_custom_call.1} parent=1 // pred_region
      _
    $region37: #{tpu_custom_call.1} parent=1 // pred_fallthru
      _
    // Predicated region
    $region38: #{tpu_custom_call.1} parent=1 // pred_check
      _
    $region39: #{tpu_custom_call.1} parent=1 // pred_check_branch
      %102 = sbr.rel (0) target = $region41
    $region40: #{tpu_custom_call.1} parent=1 // pred_region
      %104 = dma.done [#allocation3], 2048
    $region41: #{tpu_custom_call.1} parent=1 // pred_fallthru
      _
    // Predicated region
    $region42: #{tpu_custom_call.1} parent=1 // pred_check
      _
    $region43: #{tpu_custom_call.1} parent=1 // pred_check_branch
      %106 = sbr.rel (0) target = $region45
    $region44: #{tpu_custom_call.1} parent=1 // pred_region
      %108 = dma.done [#allocation6], 2048
    $region45: #{tpu_custom_call.1} parent=1 // pred_fallthru
      _
    // Predicated region
    $region46: #{tpu_custom_call.1} parent=1 // pred_check
      _
    $region47: #{tpu_custom_call.1} parent=1 // pred_check_branch
      %110 = sbr.rel (0) target = $region49
    $region48: #{tpu_custom_call.1} parent=1 // pred_region
      %112 = dma.done [#allocation6], 2048
    $region49: #{tpu_custom_call.1} parent=1 // pred_fallthru
      _
    // Predicated region
    $region50: #{tpu_custom_call.1} parent=1 // pred_check
      _
    $region51: #{tpu_custom_call.1} parent=1 // pred_check_branch
      %114 = sbr.rel (0) target = $region53
    $region52: #{tpu_custom_call.1} parent=1 // pred_region
      %116 = dma.done [#allocation9], 2048
    $region53: #{tpu_custom_call.1} parent=1 // pred_fallthru
      _
    // Predicated region
    $region54: #{tpu_custom_call.1} parent=1 // pred_check
      _
    $region55: #{tpu_custom_call.1} parent=1 // pred_check_branch
      %118 = sbr.rel (0) target = $region57
    $region56: #{tpu_custom_call.1} parent=1 // pred_region
      %120 = dma.done [#allocation9], 128
    $region57: #{tpu_custom_call.1} parent=1 // pred_fallthru
      _
    // Predicated region
    $region58: #{tpu_custom_call.1} parent=1 // pred_check
      _
    $region59: #{tpu_custom_call.1} parent=1 // pred_check_branch
      %122 = sbr.rel (0) target = $region61
    $region60: #{tpu_custom_call.1} parent=1 // pred_region
      %124 = dma.done [#allocation12], 2048
    $region61: #{tpu_custom_call.1} parent=1 // pred_fallthru
      _
    %v125 = vld [vmem:[#allocation2] sm:$0xff]
    %v126 = vld [vmem:[#allocation2 + $0x8] sm:$0xff]
    %v127 = vld [vmem:[#allocation2 + $0x10] sm:$0xff]
    %v128 = vld [vmem:[#allocation2 + $0x18] sm:$0xff]
    %v129 = vld [vmem:[#allocation2 + $0x20] sm:$0xff]
    %v130 = vld [vmem:[#allocation2 + $0x28] sm:$0xff]
    %v131 = vld [vmem:[#allocation2 + $0x30] sm:$0xff]
    %v132 = vld [vmem:[#allocation2 + $0x38] sm:$0xff]
    %v133 = vld [vmem:[#allocation2 + $0x40] sm:$0xff]
    %v134 = vld [vmem:[#allocation2 + $0x48] sm:$0xff]
    %v135 = vld [vmem:[#allocation2 + $0x50] sm:$0xff]
    %v136 = vld [vmem:[#allocation2 + $0x58] sm:$0xff]
    %v137 = vld [vmem:[#allocation2 + $0x60] sm:$0xff]
    %v138 = vld [vmem:[#allocation2 + $0x68] sm:$0xff]
    %v139 = vld [vmem:[#allocation2 + $0x70] sm:$0xff]
    %v140 = vld [vmem:[#allocation2 + $0x78] sm:$0xff]
    %v141 = vld [vmem:[#allocation5] sm:$0xff]
    %v142 = vld [vmem:[#allocation5 + $0x8] sm:$0xff]
    %v143 = vld [vmem:[#allocation5 + $0x10] sm:$0xff]
    %v144 = vld [vmem:[#allocation5 + $0x18] sm:$0xff]
    %v145 = vld [vmem:[#allocation5 + $0x20] sm:$0xff]
    %v146 = vld [vmem:[#allocation5 + $0x28] sm:$0xff]
    %v147 = vld [vmem:[#allocation5 + $0x30] sm:$0xff]
    %v148 = vld [vmem:[#allocation5 + $0x38] sm:$0xff]
    %v149 = vld [vmem:[#allocation5 + $0x40] sm:$0xff]
    %v150 = vld [vmem:[#allocation5 + $0x48] sm:$0xff]
    %v151 = vld [vmem:[#allocation5 + $0x50] sm:$0xff]
    %v152 = vld [vmem:[#allocation5 + $0x58] sm:$0xff]
    %v153 = vld [vmem:[#allocation5 + $0x60] sm:$0xff]
    %v154 = vld [vmem:[#allocation5 + $0x68] sm:$0xff]
    %v155 = vld [vmem:[#allocation5 + $0x70] sm:$0xff]
    %v156 = vld [vmem:[#allocation5 + $0x78] sm:$0xff]
    %157 = vmatpush.msra.mxu0 %v156
    %158 = vmatpush.msra.mxu0 %v155
    %159 = vmatpush.msra.mxu0 %v154
    %160 = vmatpush.msra.mxu0 %v153
    %161 = vmatpush.msra.mxu0 %v152
    %162 = vmatpush.msra.mxu0 %v151
    %163 = vmatpush.msra.mxu0 %v150
    %164 = vmatpush.msra.mxu0 %v149
    %165 = vmatpush.msra.mxu0 %v148
    %166 = vmatpush.msra.mxu0 %v147
    %167 = vmatpush.msra.mxu0 %v146
    %168 = vmatpush.msra.mxu0 %v145
    %169 = vmatpush.msra.mxu0 %v144
    %170 = vmatpush.msra.mxu0 %v143
    %171 = vmatpush.msra.mxu0 %v142
    %172 = vmatpush.msra.mxu0 %v141
    %173 = vmatmul.f32.gmra.mxu0 %v125
    %v174 = vpop.f32.mrf.mxu0
    %v175 = vadd.f32 0.0, %v174
    %176 = vmatmul.f32.gmra.mxu0 %v126
    %v177 = vpop.f32.mrf.mxu0
    %v178 = vadd.f32 0.0, %v177
    %179 = vmatmul.f32.gmra.mxu0 %v127
    %v180 = vpop.f32.mrf.mxu0
    %v181 = vadd.f32 0.0, %v180
    %182 = vmatmul.f32.gmra.mxu0 %v128
    %v183 = vpop.f32.mrf.mxu0
    %v184 = vadd.f32 0.0, %v183
    %185 = vmatmul.f32.gmra.mxu0 %v129
    %v186 = vpop.f32.mrf.mxu0
    %v187 = vadd.f32 0.0, %v186
    %188 = vmatmul.f32.gmra.mxu0 %v130
    %v189 = vpop.f32.mrf.mxu0
    %v190 = vadd.f32 0.0, %v189
    %191 = vmatmul.f32.gmra.mxu0 %v131
    %v192 = vpop.f32.mrf.mxu0
    %v193 = vadd.f32 0.0, %v192
    %194 = vmatmul.f32.gmra.mxu0 %v132
    %v195 = vpop.f32.mrf.mxu0
    %v196 = vadd.f32 0.0, %v195
    %197 = vmatmul.f32.gmra.mxu0 %v133
    %v198 = vpop.f32.mrf.mxu0
    %v199 = vadd.f32 0.0, %v198
    %200 = vmatmul.f32.gmra.mxu0 %v134
    %v201 = vpop.f32.mrf.mxu0
    %v202 = vadd.f32 0.0, %v201
    %203 = vmatmul.f32.gmra.mxu0 %v135
    %v204 = vpop.f32.mrf.mxu0
    %v205 = vadd.f32 0.0, %v204
    %206 = vmatmul.f32.gmra.mxu0 %v136
    %v207 = vpop.f32.mrf.mxu0
    %v208 = vadd.f32 0.0, %v207
    %209 = vmatmul.f32.gmra.mxu0 %v137
    %v210 = vpop.f32.mrf.mxu0
    %v211 = vadd.f32 0.0, %v210
    %212 = vmatmul.f32.gmra.mxu0 %v138
    %v213 = vpop.f32.mrf.mxu0
    %v214 = vadd.f32 0.0, %v213
    %215 = vmatmul.f32.gmra.mxu0 %v139
    %v216 = vpop.f32.mrf.mxu0
    %v217 = vadd.f32 0.0, %v216
    %218 = vmatmul.f32.gmra.mxu0 %v140
    %v219 = vpop.f32.mrf.mxu0
    %v220 = vadd.f32 0.0, %v219
    %221 = vdwg.mxu0
    %v222 = vld [vmem:[#allocation7] sm:$0xff]
    %v223 = vld [vmem:[#allocation7 + $0x8] sm:$0xff]
    %v224 = vld [vmem:[#allocation7 + $0x10] sm:$0xff]
    %v225 = vld [vmem:[#allocation7 + $0x18] sm:$0xff]
    %v226 = vld [vmem:[#allocation7 + $0x20] sm:$0xff]
    %v227 = vld [vmem:[#allocation7 + $0x28] sm:$0xff]
    %v228 = vld [vmem:[#allocation7 + $0x30] sm:$0xff]
    %v229 = vld [vmem:[#allocation7 + $0x38] sm:$0xff]
    %v230 = vld [vmem:[#allocation7 + $0x40] sm:$0xff]
    %v231 = vld [vmem:[#allocation7 + $0x48] sm:$0xff]
    %v232 = vld [vmem:[#allocation7 + $0x50] sm:$0xff]
    %v233 = vld [vmem:[#allocation7 + $0x58] sm:$0xff]
    %v234 = vld [vmem:[#allocation7 + $0x60] sm:$0xff]
    %v235 = vld [vmem:[#allocation7 + $0x68] sm:$0xff]
    %v236 = vld [vmem:[#allocation7 + $0x70] sm:$0xff]
    %v237 = vld [vmem:[#allocation7 + $0x78] sm:$0xff]
    %v238 = vld [vmem:[%s3] sm:$0x1]
    %v240 = vperm.slane %v238, 0
    %242 = vmatpush.msra.mxu0 %v237
    %243 = vmatpush.msra.mxu0 %v236
    %244 = vmatpush.msra.mxu0 %v235
    %245 = vmatpush.msra.mxu0 %v234
    %246 = vmatpush.msra.mxu0 %v233
    %247 = vmatpush.msra.mxu0 %v232
    %248 = vmatpush.msra.mxu0 %v231
    %249 = vmatpush.msra.mxu0 %v230
    %250 = vmatpush.msra.mxu0 %v229
    %251 = vmatpush.msra.mxu0 %v228
    %252 = vmatpush.msra.mxu0 %v227
    %253 = vmatpush.msra.mxu0 %v226
    %254 = vmatpush.msra.mxu0 %v225
    %255 = vmatpush.msra.mxu0 %v224
    %256 = vmatpush.msra.mxu0 %v223
    %257 = vmatpush.msra.mxu0 %v222
    %258 = vmatmul.f32.gmra.mxu0 %v175
    %v259 = vpop.f32.mrf.mxu0
    %v260 = vadd.f32 %v240, %v259
    %261 = vmatmul.f32.gmra.mxu0 %v178
    %v262 = vpop.f32.mrf.mxu0
    %v263 = vadd.f32 %v240, %v262
    %264 = vmatmul.f32.gmra.mxu0 %v181
    %v265 = vpop.f32.mrf.mxu0
    %v266 = vadd.f32 %v240, %v265
    %267 = vmatmul.f32.gmra.mxu0 %v184
    %v268 = vpop.f32.mrf.mxu0
    %v269 = vadd.f32 %v240, %v268
    %270 = vmatmul.f32.gmra.mxu0 %v187
    %v271 = vpop.f32.mrf.mxu0
    %v272 = vadd.f32 %v240, %v271
    %273 = vmatmul.f32.gmra.mxu0 %v190
    %v274 = vpop.f32.mrf.mxu0
    %v275 = vadd.f32 %v240, %v274
    %276 = vmatmul.f32.gmra.mxu0 %v193
    %v277 = vpop.f32.mrf.mxu0
    %v278 = vadd.f32 %v240, %v277
    %279 = vmatmul.f32.gmra.mxu0 %v196
    %v280 = vpop.f32.mrf.mxu0
    %v281 = vadd.f32 %v240, %v280
    %282 = vmatmul.f32.gmra.mxu0 %v199
    %v283 = vpop.f32.mrf.mxu0
    %v284 = vadd.f32 %v240, %v283
    %285 = vmatmul.f32.gmra.mxu0 %v202
    %v286 = vpop.f32.mrf.mxu0
    %v287 = vadd.f32 %v240, %v286
    %288 = vmatmul.f32.gmra.mxu0 %v205
    %v289 = vpop.f32.mrf.mxu0
    %v290 = vadd.f32 %v240, %v289
    %291 = vmatmul.f32.gmra.mxu0 %v208
    %v292 = vpop.f32.mrf.mxu0
    %v293 = vadd.f32 %v240, %v292
    %294 = vmatmul.f32.gmra.mxu0 %v211
    %v295 = vpop.f32.mrf.mxu0
    %v296 = vadd.f32 %v240, %v295
    %297 = vmatmul.f32.gmra.mxu0 %v214
    %v298 = vpop.f32.mrf.mxu0
    %v299 = vadd.f32 %v240, %v298
    %300 = vmatmul.f32.gmra.mxu0 %v217
    %v301 = vpop.f32.mrf.mxu0
    %v302 = vadd.f32 %v240, %v301
    %303 = vmatmul.f32.gmra.mxu0 %v220
    %v304 = vpop.f32.mrf.mxu0
    %v305 = vadd.f32 %v240, %v304
    %306 = vdwg.mxu0
    %v307 = vmul.f32 %v260, 0.5
    %v308 = vmul.f32 %v263, 0.5
    %v309 = vmul.f32 %v266, 0.5
    %v310 = vmul.f32 %v269, 0.5
    %v311 = vmul.f32 %v272, 0.5
    %v312 = vmul.f32 %v275, 0.5
    %v313 = vmul.f32 %v278, 0.5
    %v314 = vmul.f32 %v281, 0.5
    %v315 = vmul.f32 %v284, 0.5
    %v316 = vmul.f32 %v287, 0.5
    %v317 = vmul.f32 %v290, 0.5
    %v318 = vmul.f32 %v293, 0.5
    %v319 = vmul.f32 %v296, 0.5
    %v320 = vmul.f32 %v299, 0.5
    %v321 = vmul.f32 %v302, 0.5
    %v322 = vmul.f32 %v305, 0.5
    %v323 = vmul.f32 %v260, 0.70710677
    %v324 = vmul.f32 %v263, 0.70710677
    %v325 = vmul.f32 %v266, 0.70710677
    %v326 = vmul.f32 %v269, 0.70710677
    %v327 = vmul.f32 %v272, 0.70710677
    %v328 = vmul.f32 %v275, 0.70710677
    %v329 = vmul.f32 %v278, 0.70710677
    %v330 = vmul.f32 %v281, 0.70710677
    %v331 = vmul.f32 %v284, 0.70710677
    %v332 = vmul.f32 %v287, 0.70710677
    %v333 = vmul.f32 %v290, 0.70710677
    %v334 = vmul.f32 %v293, 0.70710677
    %v335 = vmul.f32 %v296, 0.70710677
    %v336 = vmul.f32 %v299, 0.70710677
    %v337 = vmul.f32 %v302, 0.70710677
    %v338 = vmul.f32 %v305, 0.70710677
    %v339 = vmul.f32 %v323, %v323
    %v340 = vmin.f32 16.0, %v339
    %v341 = vmul.f32 %v340, 2.1237322e-06
    %v342 = vadd.f32 %v341, 0.00028619796
    %v343 = vmul.f32 %v340, %v342
    %v344 = vadd.f32 %v343, 0.0036580483
    %v345 = vmul.f32 %v340, %v344
    %v346 = vadd.f32 %v345, 0.05243302
    %v347 = vmul.f32 %v340, %v346
    %v348 = vadd.f32 %v347, 0.18741608
    %v349 = vmul.f32 %v340, %v348
    %v350 = vadd.f32 %v349, 1.1283791
    %v351 = vmul.f32 %v323, %v350
    %v352 = vmul.f32 %v340, 3.8918573e-05
    %v353 = vadd.f32 %v352, 0.001143296
    %v354 = vmul.f32 %v340, %v353
    %v355 = vadd.f32 %v354, 0.014752088
    %v356 = vmul.f32 %v340, %v355
    %v357 = vadd.f32 %v356, 0.112945676
    %v358 = vmul.f32 %v340, %v357
    %v359 = vadd.f32 %v358, 0.4994258
    %v360 = vmul.f32 %v340, %v359
    %v361 = vadd.f32 %v360, 1.0
    %v362 = vrcp.pop %v361
    %v363 = vmul.f32 %v361, %v362
    %v364 = vsub.f32 1.0, %v363
    %v365 = vmul.f32 %v362, %v364
    %v366 = vadd.f32 %v362, %v365
    %vm367 = vweird.f32 %v361
    %vm368 = vweird.f32 %v362
    %vm369 = vmor %vm367, %vm368
    %v370 = vsel %vm369, %v362, %v366
    %v371 = vand.u32 2147483647, %v361
    %vm372 = vcmp.eq.f32.partialorder %v371, 8.507059e+37
    %v373 = vand.u32 %v361, 2147483648
    %v374 = vor.u32 1.1754944e-38, %v373
    %v375 = vsel %vm372, %v374, %v370
    %v376 = vmul.f32 %v351, %v375
    %v377 = vmin.f32 %v376, 1.0
    %v378 = vmax.f32 %v377, -1.0
    %v379 = vmul.f32 %v324, %v324
    %v380 = vmin.f32 16.0, %v379
    %v381 = vmul.f32 %v380, 2.1237322e-06
    %v382 = vadd.f32 %v381, 0.00028619796
    %v383 = vmul.f32 %v380, %v382
    %v384 = vadd.f32 %v383, 0.0036580483
    %v385 = vmul.f32 %v380, %v384
    %v386 = vadd.f32 %v385, 0.05243302
    %v387 = vmul.f32 %v380, %v386
    %v388 = vadd.f32 %v387, 0.18741608
    %v389 = vmul.f32 %v380, %v388
    %v390 = vadd.f32 %v389, 1.1283791
    %v391 = vmul.f32 %v324, %v390
    %v392 = vmul.f32 %v380, 3.8918573e-05
    %v393 = vadd.f32 %v392, 0.001143296
    %v394 = vmul.f32 %v380, %v393
    %v395 = vadd.f32 %v394, 0.014752088
    %v396 = vmul.f32 %v380, %v395
    %v397 = vadd.f32 %v396, 0.112945676
    %v398 = vmul.f32 %v380, %v397
    %v399 = vadd.f32 %v398, 0.4994258
    %v400 = vmul.f32 %v380, %v399
    %v401 = vadd.f32 %v400, 1.0
    %v402 = vrcp.pop %v401
    %v403 = vmul.f32 %v401, %v402
    %v404 = vsub.f32 1.0, %v403
    %v405 = vmul.f32 %v402, %v404
    %v406 = vadd.f32 %v402, %v405
    %vm407 = vweird.f32 %v401
    %vm408 = vweird.f32 %v402
    %vm409 = vmor %vm407, %vm408
    %v410 = vsel %vm409, %v402, %v406
    %v411 = vand.u32 2147483647, %v401
    %vm412 = vcmp.eq.f32.partialorder %v411, 8.507059e+37
    %v413 = vand.u32 %v401, 2147483648
    %v414 = vor.u32 1.1754944e-38, %v413
    %v415 = vsel %vm412, %v414, %v410
    %v416 = vmul.f32 %v391, %v415
    %v417 = vmin.f32 %v416, 1.0
    %v418 = vmax.f32 %v417, -1.0
    %v419 = vmul.f32 %v325, %v325
    %v420 = vmin.f32 16.0, %v419
    %v421 = vmul.f32 %v420, 2.1237322e-06
    %v422 = vadd.f32 %v421, 0.00028619796
    %v423 = vmul.f32 %v420, %v422
    %v424 = vadd.f32 %v423, 0.0036580483
    %v425 = vmul.f32 %v420, %v424
    %v426 = vadd.f32 %v425, 0.05243302
    %v427 = vmul.f32 %v420, %v426
    %v428 = vadd.f32 %v427, 0.18741608
    %v429 = vmul.f32 %v420, %v428
    %v430 = vadd.f32 %v429, 1.1283791
    %v431 = vmul.f32 %v325, %v430
    %v432 = vmul.f32 %v420, 3.8918573e-05
    %v433 = vadd.f32 %v432, 0.001143296
    %v434 = vmul.f32 %v420, %v433
    %v435 = vadd.f32 %v434, 0.014752088
    %v436 = vmul.f32 %v420, %v435
    %v437 = vadd.f32 %v436, 0.112945676
    %v438 = vmul.f32 %v420, %v437
    %v439 = vadd.f32 %v438, 0.4994258
    %v440 = vmul.f32 %v420, %v439
    %v441 = vadd.f32 %v440, 1.0
    %v442 = vrcp.pop %v441
    %v443 = vmul.f32 %v441, %v442
    %v444 = vsub.f32 1.0, %v443
    %v445 = vmul.f32 %v442, %v444
    %v446 = vadd.f32 %v442, %v445
    %vm447 = vweird.f32 %v441
    %vm448 = vweird.f32 %v442
    %vm449 = vmor %vm447, %vm448
    %v450 = vsel %vm449, %v442, %v446
    %v451 = vand.u32 2147483647, %v441
    %vm452 = vcmp.eq.f32.partialorder %v451, 8.507059e+37
    %v453 = vand.u32 %v441, 2147483648
    %v454 = vor.u32 1.1754944e-38, %v453
    %v455 = vsel %vm452, %v454, %v450
    %v456 = vmul.f32 %v431, %v455
    %v457 = vmin.f32 %v456, 1.0
    %v458 = vmax.f32 %v457, -1.0
    %v459 = vmul.f32 %v326, %v326
    %v460 = vmin.f32 16.0, %v459
    %v461 = vmul.f32 %v460, 2.1237322e-06
    %v462 = vadd.f32 %v461, 0.00028619796
    %v463 = vmul.f32 %v460, %v462
    %v464 = vadd.f32 %v463, 0.0036580483
    %v465 = vmul.f32 %v460, %v464
    %v466 = vadd.f32 %v465, 0.05243302
    %v467 = vmul.f32 %v460, %v466
    %v468 = vadd.f32 %v467, 0.18741608
    %v469 = vmul.f32 %v460, %v468
    %v470 = vadd.f32 %v469, 1.1283791
    %v471 = vmul.f32 %v326, %v470
    %v472 = vmul.f32 %v460, 3.8918573e-05
    %v473 = vadd.f32 %v472, 0.001143296
    %v474 = vmul.f32 %v460, %v473
    %v475 = vadd.f32 %v474, 0.014752088
    %v476 = vmul.f32 %v460, %v475
    %v477 = vadd.f32 %v476, 0.112945676
    %v478 = vmul.f32 %v460, %v477
    %v479 = vadd.f32 %v478, 0.4994258
    %v480 = vmul.f32 %v460, %v479
    %v481 = vadd.f32 %v480, 1.0
    %v482 = vrcp.pop %v481
    %v483 = vmul.f32 %v481, %v482
    %v484 = vsub.f32 1.0, %v483
    %v485 = vmul.f32 %v482, %v484
    %v486 = vadd.f32 %v482, %v485
    %vm487 = vweird.f32 %v481
    %vm488 = vweird.f32 %v482
    %vm489 = vmor %vm487, %vm488
    %v490 = vsel %vm489, %v482, %v486
    %v491 = vand.u32 2147483647, %v481
    %vm492 = vcmp.eq.f32.partialorder %v491, 8.507059e+37
    %v493 = vand.u32 %v481, 2147483648
    %v494 = vor.u32 1.1754944e-38, %v493
    %v495 = vsel %vm492, %v494, %v490
    %v496 = vmul.f32 %v471, %v495
    %v497 = vmin.f32 %v496, 1.0
    %v498 = vmax.f32 %v497, -1.0
    %v499 = vmul.f32 %v327, %v327
    %v500 = vmin.f32 16.0, %v499
    %v501 = vmul.f32 %v500, 2.1237322e-06
    %v502 = vadd.f32 %v501, 0.00028619796
    %v503 = vmul.f32 %v500, %v502
    %v504 = vadd.f32 %v503, 0.0036580483
    %v505 = vmul.f32 %v500, %v504
    %v506 = vadd.f32 %v505, 0.05243302
    %v507 = vmul.f32 %v500, %v506
    %v508 = vadd.f32 %v507, 0.18741608
    %v509 = vmul.f32 %v500, %v508
    %v510 = vadd.f32 %v509, 1.1283791
    %v511 = vmul.f32 %v327, %v510
    %v512 = vmul.f32 %v500, 3.8918573e-05
    %v513 = vadd.f32 %v512, 0.001143296
    %v514 = vmul.f32 %v500, %v513
    %v515 = vadd.f32 %v514, 0.014752088
    %v516 = vmul.f32 %v500, %v515
    %v517 = vadd.f32 %v516, 0.112945676
    %v518 = vmul.f32 %v500, %v517
    %v519 = vadd.f32 %v518, 0.4994258
    %v520 = vmul.f32 %v500, %v519
    %v521 = vadd.f32 %v520, 1.0
    %v522 = vrcp.pop %v521
    %v523 = vmul.f32 %v521, %v522
    %v524 = vsub.f32 1.0, %v523
    %v525 = vmul.f32 %v522, %v524
    %v526 = vadd.f32 %v522, %v525
    %vm527 = vweird.f32 %v521
    %vm528 = vweird.f32 %v522
    %vm529 = vmor %vm527, %vm528
    %v530 = vsel %vm529, %v522, %v526
    %v531 = vand.u32 2147483647, %v521
    %vm532 = vcmp.eq.f32.partialorder %v531, 8.507059e+37
    %v533 = vand.u32 %v521, 2147483648
    %v534 = vor.u32 1.1754944e-38, %v533
    %v535 = vsel %vm532, %v534, %v530
    %v536 = vmul.f32 %v511, %v535
    %v537 = vmin.f32 %v536, 1.0
    %v538 = vmax.f32 %v537, -1.0
    %v539 = vmul.f32 %v328, %v328
    %v540 = vmin.f32 16.0, %v539
    %v541 = vmul.f32 %v540, 2.1237322e-06
    %v542 = vadd.f32 %v541, 0.00028619796
    %v543 = vmul.f32 %v540, %v542
    %v544 = vadd.f32 %v543, 0.0036580483
    %v545 = vmul.f32 %v540, %v544
    %v546 = vadd.f32 %v545, 0.05243302
    %v547 = vmul.f32 %v540, %v546
    %v548 = vadd.f32 %v547, 0.18741608
    %v549 = vmul.f32 %v540, %v548
    %v550 = vadd.f32 %v549, 1.1283791
    %v551 = vmul.f32 %v328, %v550
    %v552 = vmul.f32 %v540, 3.8918573e-05
    %v553 = vadd.f32 %v552, 0.001143296
    %v554 = vmul.f32 %v540, %v553
    %v555 = vadd.f32 %v554, 0.014752088
    %v556 = vmul.f32 %v540, %v555
    %v557 = vadd.f32 %v556, 0.112945676
    %v558 = vmul.f32 %v540, %v557
    %v559 = vadd.f32 %v558, 0.4994258
    %v560 = vmul.f32 %v540, %v559
    %v561 = vadd.f32 %v560, 1.0
    %v562 = vrcp.pop %v561
    %v563 = vmul.f32 %v561, %v562
    %v564 = vsub.f32 1.0, %v563
    %v565 = vmul.f32 %v562, %v564
    %v566 = vadd.f32 %v562, %v565
    %vm567 = vweird.f32 %v561
    %vm568 = vweird.f32 %v562
    %vm569 = vmor %vm567, %vm568
    %v570 = vsel %vm569, %v562, %v566
    %v571 = vand.u32 2147483647, %v561
    %vm572 = vcmp.eq.f32.partialorder %v571, 8.507059e+37
    %v573 = vand.u32 %v561, 2147483648
    %v574 = vor.u32 1.1754944e-38, %v573
    %v575 = vsel %vm572, %v574, %v570
    %v576 = vmul.f32 %v551, %v575
    %v577 = vmin.f32 %v576, 1.0
    %v578 = vmax.f32 %v577, -1.0
    %v579 = vmul.f32 %v329, %v329
    %v580 = vmin.f32 16.0, %v579
    %v581 = vmul.f32 %v580, 2.1237322e-06
    %v582 = vadd.f32 %v581, 0.00028619796
    %v583 = vmul.f32 %v580, %v582
    %v584 = vadd.f32 %v583, 0.0036580483
    %v585 = vmul.f32 %v580, %v584
    %v586 = vadd.f32 %v585, 0.05243302
    %v587 = vmul.f32 %v580, %v586
    %v588 = vadd.f32 %v587, 0.18741608
    %v589 = vmul.f32 %v580, %v588
    %v590 = vadd.f32 %v589, 1.1283791
    %v591 = vmul.f32 %v329, %v590
    %v592 = vmul.f32 %v580, 3.8918573e-05
    %v593 = vadd.f32 %v592, 0.001143296
    %v594 = vmul.f32 %v580, %v593
    %v595 = vadd.f32 %v594, 0.014752088
    %v596 = vmul.f32 %v580, %v595
    %v597 = vadd.f32 %v596, 0.112945676
    %v598 = vmul.f32 %v580, %v597
    %v599 = vadd.f32 %v598, 0.4994258
    %v600 = vmul.f32 %v580, %v599
    %v601 = vadd.f32 %v600, 1.0
    %v602 = vrcp.pop %v601
    %v603 = vmul.f32 %v601, %v602
    %v604 = vsub.f32 1.0, %v603
    %v605 = vmul.f32 %v602, %v604
    %v606 = vadd.f32 %v602, %v605
    %vm607 = vweird.f32 %v601
    %vm608 = vweird.f32 %v602
    %vm609 = vmor %vm607, %vm608
    %v610 = vsel %vm609, %v602, %v606
    %v611 = vand.u32 2147483647, %v601
    %vm612 = vcmp.eq.f32.partialorder %v611, 8.507059e+37
    %v613 = vand.u32 %v601, 2147483648
    %v614 = vor.u32 1.1754944e-38, %v613
    %v615 = vsel %vm612, %v614, %v610
    %v616 = vmul.f32 %v591, %v615
    %v617 = vmin.f32 %v616, 1.0
    %v618 = vmax.f32 %v617, -1.0
    %v619 = vmul.f32 %v330, %v330
    %v620 = vmin.f32 16.0, %v619
    %v621 = vmul.f32 %v620, 2.1237322e-06
    %v622 = vadd.f32 %v621, 0.00028619796
    %v623 = vmul.f32 %v620, %v622
    %v624 = vadd.f32 %v623, 0.0036580483
    %v625 = vmul.f32 %v620, %v624
    %v626 = vadd.f32 %v625, 0.05243302
    %v627 = vmul.f32 %v620, %v626
    %v628 = vadd.f32 %v627, 0.18741608
    %v629 = vmul.f32 %v620, %v628
    %v630 = vadd.f32 %v629, 1.1283791
    %v631 = vmul.f32 %v330, %v630
    %v632 = vmul.f32 %v620, 3.8918573e-05
    %v633 = vadd.f32 %v632, 0.001143296
    %v634 = vmul.f32 %v620, %v633
    %v635 = vadd.f32 %v634, 0.014752088
    %v636 = vmul.f32 %v620, %v635
    %v637 = vadd.f32 %v636, 0.112945676
    %v638 = vmul.f32 %v620, %v637
    %v639 = vadd.f32 %v638, 0.4994258
    %v640 = vmul.f32 %v620, %v639
    %v641 = vadd.f32 %v640, 1.0
    %v642 = vrcp.pop %v641
    %v643 = vmul.f32 %v641, %v642
    %v644 = vsub.f32 1.0, %v643
    %v645 = vmul.f32 %v642, %v644
    %v646 = vadd.f32 %v642, %v645
    %vm647 = vweird.f32 %v641
    %vm648 = vweird.f32 %v642
    %vm649 = vmor %vm647, %vm648
    %v650 = vsel %vm649, %v642, %v646
    %v651 = vand.u32 2147483647, %v641
    %vm652 = vcmp.eq.f32.partialorder %v651, 8.507059e+37
    %v653 = vand.u32 %v641, 2147483648
    %v654 = vor.u32 1.1754944e-38, %v653
    %v655 = vsel %vm652, %v654, %v650
    %v656 = vmul.f32 %v631, %v655
    %v657 = vmin.f32 %v656, 1.0
    %v658 = vmax.f32 %v657, -1.0
    %v659 = vmul.f32 %v331, %v331
    %v660 = vmin.f32 16.0, %v659
    %v661 = vmul.f32 %v660, 2.1237322e-06
    %v662 = vadd.f32 %v661, 0.00028619796
    %v663 = vmul.f32 %v660, %v662
    %v664 = vadd.f32 %v663, 0.0036580483
    %v665 = vmul.f32 %v660, %v664
    %v666 = vadd.f32 %v665, 0.05243302
    %v667 = vmul.f32 %v660, %v666
    %v668 = vadd.f32 %v667, 0.18741608
    %v669 = vmul.f32 %v660, %v668
    %v670 = vadd.f32 %v669, 1.1283791
    %v671 = vmul.f32 %v331, %v670
    %v672 = vmul.f32 %v660, 3.8918573e-05
    %v673 = vadd.f32 %v672, 0.001143296
    %v674 = vmul.f32 %v660, %v673
    %v675 = vadd.f32 %v674, 0.014752088
    %v676 = vmul.f32 %v660, %v675
    %v677 = vadd.f32 %v676, 0.112945676
    %v678 = vmul.f32 %v660, %v677
    %v679 = vadd.f32 %v678, 0.4994258
    %v680 = vmul.f32 %v660, %v679
    %v681 = vadd.f32 %v680, 1.0
    %v682 = vrcp.pop %v681
    %v683 = vmul.f32 %v681, %v682
    %v684 = vsub.f32 1.0, %v683
    %v685 = vmul.f32 %v682, %v684
    %v686 = vadd.f32 %v682, %v685
    %vm687 = vweird.f32 %v681
    %vm688 = vweird.f32 %v682
    %vm689 = vmor %vm687, %vm688
    %v690 = vsel %vm689, %v682, %v686
    %v691 = vand.u32 2147483647, %v681
    %vm692 = vcmp.eq.f32.partialorder %v691, 8.507059e+37
    %v693 = vand.u32 %v681, 2147483648
    %v694 = vor.u32 1.1754944e-38, %v693
    %v695 = vsel %vm692, %v694, %v690
    %v696 = vmul.f32 %v671, %v695
    %v697 = vmin.f32 %v696, 1.0
    %v698 = vmax.f32 %v697, -1.0
    %v699 = vmul.f32 %v332, %v332
    %v700 = vmin.f32 16.0, %v699
    %v701 = vmul.f32 %v700, 2.1237322e-06
    %v702 = vadd.f32 %v701, 0.00028619796
    %v703 = vmul.f32 %v700, %v702
    %v704 = vadd.f32 %v703, 0.0036580483
    %v705 = vmul.f32 %v700, %v704
    %v706 = vadd.f32 %v705, 0.05243302
    %v707 = vmul.f32 %v700, %v706
    %v708 = vadd.f32 %v707, 0.18741608
    %v709 = vmul.f32 %v700, %v708
    %v710 = vadd.f32 %v709, 1.1283791
    %v711 = vmul.f32 %v332, %v710
    %v712 = vmul.f32 %v700, 3.8918573e-05
    %v713 = vadd.f32 %v712, 0.001143296
    %v714 = vmul.f32 %v700, %v713
    %v715 = vadd.f32 %v714, 0.014752088
    %v716 = vmul.f32 %v700, %v715
    %v717 = vadd.f32 %v716, 0.112945676
    %v718 = vmul.f32 %v700, %v717
    %v719 = vadd.f32 %v718, 0.4994258
    %v720 = vmul.f32 %v700, %v719
    %v721 = vadd.f32 %v720, 1.0
    %v722 = vrcp.pop %v721
    %v723 = vmul.f32 %v721, %v722
    %v724 = vsub.f32 1.0, %v723
    %v725 = vmul.f32 %v722, %v724
    %v726 = vadd.f32 %v722, %v725
    %vm727 = vweird.f32 %v721
    %vm728 = vweird.f32 %v722
    %vm729 = vmor %vm727, %vm728
    %v730 = vsel %vm729, %v722, %v726
    %v731 = vand.u32 2147483647, %v721
    %vm732 = vcmp.eq.f32.partialorder %v731, 8.507059e+37
    %v733 = vand.u32 %v721, 2147483648
    %v734 = vor.u32 1.1754944e-38, %v733
    %v735 = vsel %vm732, %v734, %v730
    %v736 = vmul.f32 %v711, %v735
    %v737 = vmin.f32 %v736, 1.0
    %v738 = vmax.f32 %v737, -1.0
    %v739 = vmul.f32 %v333, %v333
    %v740 = vmin.f32 16.0, %v739
    %v741 = vmul.f32 %v740, 2.1237322e-06
    %v742 = vadd.f32 %v741, 0.00028619796
    %v743 = vmul.f32 %v740, %v742
    %v744 = vadd.f32 %v743, 0.0036580483
    %v745 = vmul.f32 %v740, %v744
    %v746 = vadd.f32 %v745, 0.05243302
    %v747 = vmul.f32 %v740, %v746
    %v748 = vadd.f32 %v747, 0.18741608
    %v749 = vmul.f32 %v740, %v748
    %v750 = vadd.f32 %v749, 1.1283791
    %v751 = vmul.f32 %v333, %v750
    %v752 = vmul.f32 %v740, 3.8918573e-05
    %v753 = vadd.f32 %v752, 0.001143296
    %v754 = vmul.f32 %v740, %v753
    %v755 = vadd.f32 %v754, 0.014752088
    %v756 = vmul.f32 %v740, %v755
    %v757 = vadd.f32 %v756, 0.112945676
    %v758 = vmul.f32 %v740, %v757
    %v759 = vadd.f32 %v758, 0.4994258
    %v760 = vmul.f32 %v740, %v759
    %v761 = vadd.f32 %v760, 1.0
    %v762 = vrcp.pop %v761
    %v763 = vmul.f32 %v761, %v762
    %v764 = vsub.f32 1.0, %v763
    %v765 = vmul.f32 %v762, %v764
    %v766 = vadd.f32 %v762, %v765
    %vm767 = vweird.f32 %v761
    %vm768 = vweird.f32 %v762
    %vm769 = vmor %vm767, %vm768
    %v770 = vsel %vm769, %v762, %v766
    %v771 = vand.u32 2147483647, %v761
    %vm772 = vcmp.eq.f32.partialorder %v771, 8.507059e+37
    %v773 = vand.u32 %v761, 2147483648
    %v774 = vor.u32 1.1754944e-38, %v773
    %v775 = vsel %vm772, %v774, %v770
    %v776 = vmul.f32 %v751, %v775
    %v777 = vmin.f32 %v776, 1.0
    %v778 = vmax.f32 %v777, -1.0
    %v779 = vmul.f32 %v334, %v334
    %v780 = vmin.f32 16.0, %v779
    %v781 = vmul.f32 %v780, 2.1237322e-06
    %v782 = vadd.f32 %v781, 0.00028619796
    %v783 = vmul.f32 %v780, %v782
    %v784 = vadd.f32 %v783, 0.0036580483
    %v785 = vmul.f32 %v780, %v784
    %v786 = vadd.f32 %v785, 0.05243302
    %v787 = vmul.f32 %v780, %v786
    %v788 = vadd.f32 %v787, 0.18741608
    %v789 = vmul.f32 %v780, %v788
    %v790 = vadd.f32 %v789, 1.1283791
    %v791 = vmul.f32 %v334, %v790
    %v792 = vmul.f32 %v780, 3.8918573e-05
    %v793 = vadd.f32 %v792, 0.001143296
    %v794 = vmul.f32 %v780, %v793
    %v795 = vadd.f32 %v794, 0.014752088
    %v796 = vmul.f32 %v780, %v795
    %v797 = vadd.f32 %v796, 0.112945676
    %v798 = vmul.f32 %v780, %v797
    %v799 = vadd.f32 %v798, 0.4994258
    %v800 = vmul.f32 %v780, %v799
    %v801 = vadd.f32 %v800, 1.0
    %v802 = vrcp.pop %v801
    %v803 = vmul.f32 %v801, %v802
    %v804 = vsub.f32 1.0, %v803
    %v805 = vmul.f32 %v802, %v804
    %v806 = vadd.f32 %v802, %v805
    %vm807 = vweird.f32 %v801
    %vm808 = vweird.f32 %v802
    %vm809 = vmor %vm807, %vm808
    %v810 = vsel %vm809, %v802, %v806
    %v811 = vand.u32 2147483647, %v801
    %vm812 = vcmp.eq.f32.partialorder %v811, 8.507059e+37
    %v813 = vand.u32 %v801, 2147483648
    %v814 = vor.u32 1.1754944e-38, %v813
    %v815 = vsel %vm812, %v814, %v810
    %v816 = vmul.f32 %v791, %v815
    %v817 = vmin.f32 %v816, 1.0
    %v818 = vmax.f32 %v817, -1.0
    %v819 = vmul.f32 %v335, %v335
    %v820 = vmin.f32 16.0, %v819
    %v821 = vmul.f32 %v820, 2.1237322e-06
    %v822 = vadd.f32 %v821, 0.00028619796
    %v823 = vmul.f32 %v820, %v822
    %v824 = vadd.f32 %v823, 0.0036580483
    %v825 = vmul.f32 %v820, %v824
    %v826 = vadd.f32 %v825, 0.05243302
    %v827 = vmul.f32 %v820, %v826
    %v828 = vadd.f32 %v827, 0.18741608
    %v829 = vmul.f32 %v820, %v828
    %v830 = vadd.f32 %v829, 1.1283791
    %v831 = vmul.f32 %v335, %v830
    %v832 = vmul.f32 %v820, 3.8918573e-05
    %v833 = vadd.f32 %v832, 0.001143296
    %v834 = vmul.f32 %v820, %v833
    %v835 = vadd.f32 %v834, 0.014752088
    %v836 = vmul.f32 %v820, %v835
    %v837 = vadd.f32 %v836, 0.112945676
    %v838 = vmul.f32 %v820, %v837
    %v839 = vadd.f32 %v838, 0.4994258
    %v840 = vmul.f32 %v820, %v839
    %v841 = vadd.f32 %v840, 1.0
    %v842 = vrcp.pop %v841
    %v843 = vmul.f32 %v841, %v842
    %v844 = vsub.f32 1.0, %v843
    %v845 = vmul.f32 %v842, %v844
    %v846 = vadd.f32 %v842, %v845
    %vm847 = vweird.f32 %v841
    %vm848 = vweird.f32 %v842
    %vm849 = vmor %vm847, %vm848
    %v850 = vsel %vm849, %v842, %v846
    %v851 = vand.u32 2147483647, %v841
    %vm852 = vcmp.eq.f32.partialorder %v851, 8.507059e+37
    %v853 = vand.u32 %v841, 2147483648
    %v854 = vor.u32 1.1754944e-38, %v853
    %v855 = vsel %vm852, %v854, %v850
    %v856 = vmul.f32 %v831, %v855
    %v857 = vmin.f32 %v856, 1.0
    %v858 = vmax.f32 %v857, -1.0
    %v859 = vmul.f32 %v336, %v336
    %v860 = vmin.f32 16.0, %v859
    %v861 = vmul.f32 %v860, 2.1237322e-06
    %v862 = vadd.f32 %v861, 0.00028619796
    %v863 = vmul.f32 %v860, %v862
    %v864 = vadd.f32 %v863, 0.0036580483
    %v865 = vmul.f32 %v860, %v864
    %v866 = vadd.f32 %v865, 0.05243302
    %v867 = vmul.f32 %v860, %v866
    %v868 = vadd.f32 %v867, 0.18741608
    %v869 = vmul.f32 %v860, %v868
    %v870 = vadd.f32 %v869, 1.1283791
    %v871 = vmul.f32 %v336, %v870
    %v872 = vmul.f32 %v860, 3.8918573e-05
    %v873 = vadd.f32 %v872, 0.001143296
    %v874 = vmul.f32 %v860, %v873
    %v875 = vadd.f32 %v874, 0.014752088
    %v876 = vmul.f32 %v860, %v875
    %v877 = vadd.f32 %v876, 0.112945676
    %v878 = vmul.f32 %v860, %v877
    %v879 = vadd.f32 %v878, 0.4994258
    %v880 = vmul.f32 %v860, %v879
    %v881 = vadd.f32 %v880, 1.0
    %v882 = vrcp.pop %v881
    %v883 = vmul.f32 %v881, %v882
    %v884 = vsub.f32 1.0, %v883
    %v885 = vmul.f32 %v882, %v884
    %v886 = vadd.f32 %v882, %v885
    %vm887 = vweird.f32 %v881
    %vm888 = vweird.f32 %v882
    %vm889 = vmor %vm887, %vm888
    %v890 = vsel %vm889, %v882, %v886
    %v891 = vand.u32 2147483647, %v881
    %vm892 = vcmp.eq.f32.partialorder %v891, 8.507059e+37
    %v893 = vand.u32 %v881, 2147483648
    %v894 = vor.u32 1.1754944e-38, %v893
    %v895 = vsel %vm892, %v894, %v890
    %v896 = vmul.f32 %v871, %v895
    %v897 = vmin.f32 %v896, 1.0
    %v898 = vmax.f32 %v897, -1.0
    %v899 = vmul.f32 %v337, %v337
    %v900 = vmin.f32 16.0, %v899
    %v901 = vmul.f32 %v900, 2.1237322e-06
    %v902 = vadd.f32 %v901, 0.00028619796
    %v903 = vmul.f32 %v900, %v902
    %v904 = vadd.f32 %v903, 0.0036580483
    %v905 = vmul.f32 %v900, %v904
    %v906 = vadd.f32 %v905, 0.05243302
    %v907 = vmul.f32 %v900, %v906
    %v908 = vadd.f32 %v907, 0.18741608
    %v909 = vmul.f32 %v900, %v908
    %v910 = vadd.f32 %v909, 1.1283791
    %v911 = vmul.f32 %v337, %v910
    %v912 = vmul.f32 %v900, 3.8918573e-05
    %v913 = vadd.f32 %v912, 0.001143296
    %v914 = vmul.f32 %v900, %v913
    %v915 = vadd.f32 %v914, 0.014752088
    %v916 = vmul.f32 %v900, %v915
    %v917 = vadd.f32 %v916, 0.112945676
    %v918 = vmul.f32 %v900, %v917
    %v919 = vadd.f32 %v918, 0.4994258
    %v920 = vmul.f32 %v900, %v919
    %v921 = vadd.f32 %v920, 1.0
    %v922 = vrcp.pop %v921
    %v923 = vmul.f32 %v921, %v922
    %v924 = vsub.f32 1.0, %v923
    %v925 = vmul.f32 %v922, %v924
    %v926 = vadd.f32 %v922, %v925
    %vm927 = vweird.f32 %v921
    %vm928 = vweird.f32 %v922
    %vm929 = vmor %vm927, %vm928
    %v930 = vsel %vm929, %v922, %v926
    %v931 = vand.u32 2147483647, %v921
    %vm932 = vcmp.eq.f32.partialorder %v931, 8.507059e+37
    %v933 = vand.u32 %v921, 2147483648
    %v934 = vor.u32 1.1754944e-38, %v933
    %v935 = vsel %vm932, %v934, %v930
    %v936 = vmul.f32 %v911, %v935
    %v937 = vmin.f32 %v936, 1.0
    %v938 = vmax.f32 %v937, -1.0
    %v939 = vmul.f32 %v338, %v338
    %v940 = vmin.f32 16.0, %v939
    %v941 = vmul.f32 %v940, 2.1237322e-06
    %v942 = vadd.f32 %v941, 0.00028619796
    %v943 = vmul.f32 %v940, %v942
    %v944 = vadd.f32 %v943, 0.0036580483
    %v945 = vmul.f32 %v940, %v944
    %v946 = vadd.f32 %v945, 0.05243302
    %v947 = vmul.f32 %v940, %v946
    %v948 = vadd.f32 %v947, 0.18741608
    %v949 = vmul.f32 %v940, %v948
    %v950 = vadd.f32 %v949, 1.1283791
    %v951 = vmul.f32 %v338, %v950
    %v952 = vmul.f32 %v940, 3.8918573e-05
    %v953 = vadd.f32 %v952, 0.001143296
    %v954 = vmul.f32 %v940, %v953
    %v955 = vadd.f32 %v954, 0.014752088
    %v956 = vmul.f32 %v940, %v955
    %v957 = vadd.f32 %v956, 0.112945676
    %v958 = vmul.f32 %v940, %v957
    %v959 = vadd.f32 %v958, 0.4994258
    %v960 = vmul.f32 %v940, %v959
    %v961 = vadd.f32 %v960, 1.0
    %v962 = vrcp.pop %v961
    %v963 = vmul.f32 %v961, %v962
    %v964 = vsub.f32 1.0, %v963
    %v965 = vmul.f32 %v962, %v964
    %v966 = vadd.f32 %v962, %v965
    %vm967 = vweird.f32 %v961
    %vm968 = vweird.f32 %v962
    %vm969 = vmor %vm967, %vm968
    %v970 = vsel %vm969, %v962, %v966
    %v971 = vand.u32 2147483647, %v961
    %vm972 = vcmp.eq.f32.partialorder %v971, 8.507059e+37
    %v973 = vand.u32 %v961, 2147483648
    %v974 = vor.u32 1.1754944e-38, %v973
    %v975 = vsel %vm972, %v974, %v970
    %v976 = vmul.f32 %v951, %v975
    %v977 = vmin.f32 %v976, 1.0
    %v978 = vmax.f32 %v977, -1.0
    %v979 = vadd.f32 %v378, 1.0
    %v980 = vadd.f32 %v418, 1.0
    %v981 = vadd.f32 %v458, 1.0
    %v982 = vadd.f32 %v498, 1.0
    %v983 = vadd.f32 %v538, 1.0
    %v984 = vadd.f32 %v578, 1.0
    %v985 = vadd.f32 %v618, 1.0
    %v986 = vadd.f32 %v658, 1.0
    %v987 = vadd.f32 %v698, 1.0
    %v988 = vadd.f32 %v738, 1.0
    %v989 = vadd.f32 %v778, 1.0
    %v990 = vadd.f32 %v818, 1.0
    %v991 = vadd.f32 %v858, 1.0
    %v992 = vadd.f32 %v898, 1.0
    %v993 = vadd.f32 %v938, 1.0
    %v994 = vadd.f32 %v978, 1.0
    %v995 = vmul.f32 %v307, %v979
    %v996 = vmul.f32 %v308, %v980
    %v997 = vmul.f32 %v309, %v981
    %v998 = vmul.f32 %v310, %v982
    %v999 = vmul.f32 %v311, %v983
    %v1000 = vmul.f32 %v312, %v984
    %v1001 = vmul.f32 %v313, %v985
    %v1002 = vmul.f32 %v314, %v986
    %v1003 = vmul.f32 %v315, %v987
    %v1004 = vmul.f32 %v316, %v988
    %v1005 = vmul.f32 %v317, %v989
    %v1006 = vmul.f32 %v318, %v990
    %v1007 = vmul.f32 %v319, %v991
    %v1008 = vmul.f32 %v320, %v992
    %v1009 = vmul.f32 %v321, %v993
    %v1010 = vmul.f32 %v322, %v994
    %v1011 = vld [vmem:[#allocation8] sm:$0xff]
    %v1012 = vld [vmem:[#allocation8 + $0x8] sm:$0xff]
    %v1013 = vld [vmem:[#allocation8 + $0x10] sm:$0xff]
    %v1014 = vld [vmem:[#allocation8 + $0x18] sm:$0xff]
    %v1015 = vld [vmem:[#allocation8 + $0x20] sm:$0xff]
    %v1016 = vld [vmem:[#allocation8 + $0x28] sm:$0xff]
    %v1017 = vld [vmem:[#allocation8 + $0x30] sm:$0xff]
    %v1018 = vld [vmem:[#allocation8 + $0x38] sm:$0xff]
    %v1019 = vld [vmem:[#allocation8 + $0x40] sm:$0xff]
    %v1020 = vld [vmem:[#allocation8 + $0x48] sm:$0xff]
    %v1021 = vld [vmem:[#allocation8 + $0x50] sm:$0xff]
    %v1022 = vld [vmem:[#allocation8 + $0x58] sm:$0xff]
    %v1023 = vld [vmem:[#allocation8 + $0x60] sm:$0xff]
    %v1024 = vld [vmem:[#allocation8 + $0x68] sm:$0xff]
    %v1025 = vld [vmem:[#allocation8 + $0x70] sm:$0xff]
    %v1026 = vld [vmem:[#allocation8 + $0x78] sm:$0xff]
    %1027 = vmatpush.msra.mxu0 %v1026
    %1028 = vmatpush.msra.mxu0 %v1025
    %1029 = vmatpush.msra.mxu0 %v1024
    %1030 = vmatpush.msra.mxu0 %v1023
    %1031 = vmatpush.msra.mxu0 %v1022
    %1032 = vmatpush.msra.mxu0 %v1021
    %1033 = vmatpush.msra.mxu0 %v1020
    %1034 = vmatpush.msra.mxu0 %v1019
    %1035 = vmatpush.msra.mxu0 %v1018
    %1036 = vmatpush.msra.mxu0 %v1017
    %1037 = vmatpush.msra.mxu0 %v1016
    %1038 = vmatpush.msra.mxu0 %v1015
    %1039 = vmatpush.msra.mxu0 %v1014
    %1040 = vmatpush.msra.mxu0 %v1013
    %1041 = vmatpush.msra.mxu0 %v1012
    %1042 = vmatpush.msra.mxu0 %v1011
    %1043 = vmatmul.f32.gmra.mxu0 %v995
    %v1044 = vpop.f32.mrf.mxu0
    %v1045 = vadd.f32 0.0, %v1044
    %1046 = vmatmul.f32.gmra.mxu0 %v996
    %v1047 = vpop.f32.mrf.mxu0
    %v1048 = vadd.f32 0.0, %v1047
    %1049 = vmatmul.f32.gmra.mxu0 %v997
    %v1050 = vpop.f32.mrf.mxu0
    %v1051 = vadd.f32 0.0, %v1050
    %1052 = vmatmul.f32.gmra.mxu0 %v998
    %v1053 = vpop.f32.mrf.mxu0
    %v1054 = vadd.f32 0.0, %v1053
    %1055 = vmatmul.f32.gmra.mxu0 %v999
    %v1056 = vpop.f32.mrf.mxu0
    %v1057 = vadd.f32 0.0, %v1056
    %1058 = vmatmul.f32.gmra.mxu0 %v1000
    %v1059 = vpop.f32.mrf.mxu0
    %v1060 = vadd.f32 0.0, %v1059
    %1061 = vmatmul.f32.gmra.mxu0 %v1001
    %v1062 = vpop.f32.mrf.mxu0
    %v1063 = vadd.f32 0.0, %v1062
    %1064 = vmatmul.f32.gmra.mxu0 %v1002
    %v1065 = vpop.f32.mrf.mxu0
    %v1066 = vadd.f32 0.0, %v1065
    %1067 = vmatmul.f32.gmra.mxu0 %v1003
    %v1068 = vpop.f32.mrf.mxu0
    %v1069 = vadd.f32 0.0, %v1068
    %1070 = vmatmul.f32.gmra.mxu0 %v1004
    %v1071 = vpop.f32.mrf.mxu0
    %v1072 = vadd.f32 0.0, %v1071
    %1073 = vmatmul.f32.gmra.mxu0 %v1005
    %v1074 = vpop.f32.mrf.mxu0
    %v1075 = vadd.f32 0.0, %v1074
    %1076 = vmatmul.f32.gmra.mxu0 %v1006
    %v1077 = vpop.f32.mrf.mxu0
    %v1078 = vadd.f32 0.0, %v1077
    %1079 = vmatmul.f32.gmra.mxu0 %v1007
    %v1080 = vpop.f32.mrf.mxu0
    %v1081 = vadd.f32 0.0, %v1080
    %1082 = vmatmul.f32.gmra.mxu0 %v1008
    %v1083 = vpop.f32.mrf.mxu0
    %v1084 = vadd.f32 0.0, %v1083
    %1085 = vmatmul.f32.gmra.mxu0 %v1009
    %v1086 = vpop.f32.mrf.mxu0
    %v1087 = vadd.f32 0.0, %v1086
    %1088 = vmatmul.f32.gmra.mxu0 %v1010
    %v1089 = vpop.f32.mrf.mxu0
    %v1090 = vadd.f32 0.0, %v1089
    %1091 = vdwg.mxu0
    %v1092 = vld [vmem:[%s5] sm:$0x1]
    %v1094 = vperm.slane %v1092, 0
    %1096 = vmatpush.msra.mxu0 %v1090
    %1097 = vmatpush.msra.mxu0 %v1087
    %1098 = vmatpush.msra.mxu0 %v1084
    %1099 = vmatpush.msra.mxu0 %v1081
    %1100 = vmatpush.msra.mxu0 %v1078
    %1101 = vmatpush.msra.mxu0 %v1075
    %1102 = vmatpush.msra.mxu0 %v1072
    %1103 = vmatpush.msra.mxu0 %v1069
    %1104 = vmatpush.msra.mxu0 %v1066
    %1105 = vmatpush.msra.mxu0 %v1063
    %1106 = vmatpush.msra.mxu0 %v1060
    %1107 = vmatpush.msra.mxu0 %v1057
    %1108 = vmatpush.msra.mxu0 %v1054
    %1109 = vmatpush.msra.mxu0 %v1051
    %1110 = vmatpush.msra.mxu0 %v1048
    %1111 = vmatpush.msra.mxu0 %v1045
    %1112 = vmatmul.f32.gmra.mxu0 %v125
    %v1113 = vpop.f32.mrf.mxu0
    %v1114 = vadd.f32 %v1094, %v1113
    %1115 = vmatmul.f32.gmra.mxu0 %v126
    %v1116 = vpop.f32.mrf.mxu0
    %v1117 = vadd.f32 %v1094, %v1116
    %1118 = vmatmul.f32.gmra.mxu0 %v127
    %v1119 = vpop.f32.mrf.mxu0
    %v1120 = vadd.f32 %v1094, %v1119
    %1121 = vmatmul.f32.gmra.mxu0 %v128
    %v1122 = vpop.f32.mrf.mxu0
    %v1123 = vadd.f32 %v1094, %v1122
    %1124 = vmatmul.f32.gmra.mxu0 %v129
    %v1125 = vpop.f32.mrf.mxu0
    %v1126 = vadd.f32 %v1094, %v1125
    %1127 = vmatmul.f32.gmra.mxu0 %v130
    %v1128 = vpop.f32.mrf.mxu0
    %v1129 = vadd.f32 %v1094, %v1128
    %1130 = vmatmul.f32.gmra.mxu0 %v131
    %v1131 = vpop.f32.mrf.mxu0
    %v1132 = vadd.f32 %v1094, %v1131
    %1133 = vmatmul.f32.gmra.mxu0 %v132
    %v1134 = vpop.f32.mrf.mxu0
    %v1135 = vadd.f32 %v1094, %v1134
    %1136 = vmatmul.f32.gmra.mxu0 %v133
    %v1137 = vpop.f32.mrf.mxu0
    %v1138 = vadd.f32 %v1094, %v1137
    %1139 = vmatmul.f32.gmra.mxu0 %v134
    %v1140 = vpop.f32.mrf.mxu0
    %v1141 = vadd.f32 %v1094, %v1140
    %1142 = vmatmul.f32.gmra.mxu0 %v135
    %v1143 = vpop.f32.mrf.mxu0
    %v1144 = vadd.f32 %v1094, %v1143
    %1145 = vmatmul.f32.gmra.mxu0 %v136
    %v1146 = vpop.f32.mrf.mxu0
    %v1147 = vadd.f32 %v1094, %v1146
    %1148 = vmatmul.f32.gmra.mxu0 %v137
    %v1149 = vpop.f32.mrf.mxu0
    %v1150 = vadd.f32 %v1094, %v1149
    %1151 = vmatmul.f32.gmra.mxu0 %v138
    %v1152 = vpop.f32.mrf.mxu0
    %v1153 = vadd.f32 %v1094, %v1152
    %1154 = vmatmul.f32.gmra.mxu0 %v139
    %v1155 = vpop.f32.mrf.mxu0
    %v1156 = vadd.f32 %v1094, %v1155
    %1157 = vmatmul.f32.gmra.mxu0 %v140
    %v1158 = vpop.f32.mrf.mxu0
    %v1159 = vadd.f32 %v1094, %v1158
    %1160 = vdwg.mxu0
    %v1161 = vmul.f32 %v1114, 0.5
    %v1162 = vmul.f32 %v1117, 0.5
    %v1163 = vmul.f32 %v1120, 0.5
    %v1164 = vmul.f32 %v1123, 0.5
    %v1165 = vmul.f32 %v1126, 0.5
    %v1166 = vmul.f32 %v1129, 0.5
    %v1167 = vmul.f32 %v1132, 0.5
    %v1168 = vmul.f32 %v1135, 0.5
    %v1169 = vmul.f32 %v1138, 0.5
    %v1170 = vmul.f32 %v1141, 0.5
    %v1171 = vmul.f32 %v1144, 0.5
    %v1172 = vmul.f32 %v1147, 0.5
    %v1173 = vmul.f32 %v1150, 0.5
    %v1174 = vmul.f32 %v1153, 0.5
    %v1175 = vmul.f32 %v1156, 0.5
    %v1176 = vmul.f32 %v1159, 0.5
    %v1177 = vmul.f32 %v1114, 0.70710677
    %v1178 = vmul.f32 %v1117, 0.70710677
    %v1179 = vmul.f32 %v1120, 0.70710677
    %v1180 = vmul.f32 %v1123, 0.70710677
    %v1181 = vmul.f32 %v1126, 0.70710677
    %v1182 = vmul.f32 %v1129, 0.70710677
    %v1183 = vmul.f32 %v1132, 0.70710677
    %v1184 = vmul.f32 %v1135, 0.70710677
    %v1185 = vmul.f32 %v1138, 0.70710677
    %v1186 = vmul.f32 %v1141, 0.70710677
    %v1187 = vmul.f32 %v1144, 0.70710677
    %v1188 = vmul.f32 %v1147, 0.70710677
    %v1189 = vmul.f32 %v1150, 0.70710677
    %v1190 = vmul.f32 %v1153, 0.70710677
    %v1191 = vmul.f32 %v1156, 0.70710677
    %v1192 = vmul.f32 %v1159, 0.70710677
    %v1193 = vmul.f32 %v1177, %v1177
    %v1194 = vmin.f32 16.0, %v1193
    %v1195 = vmul.f32 %v1194, 2.1237322e-06
    %v1196 = vadd.f32 %v1195, 0.00028619796
    %v1197 = vmul.f32 %v1194, %v1196
    %v1198 = vadd.f32 %v1197, 0.0036580483
    %v1199 = vmul.f32 %v1194, %v1198
    %v1200 = vadd.f32 %v1199, 0.05243302
    %v1201 = vmul.f32 %v1194, %v1200
    %v1202 = vadd.f32 %v1201, 0.18741608
    %v1203 = vmul.f32 %v1194, %v1202
    %v1204 = vadd.f32 %v1203, 1.1283791
    %v1205 = vmul.f32 %v1177, %v1204
    %v1206 = vmul.f32 %v1194, 3.8918573e-05
    %v1207 = vadd.f32 %v1206, 0.001143296
    %v1208 = vmul.f32 %v1194, %v1207
    %v1209 = vadd.f32 %v1208, 0.014752088
    %v1210 = vmul.f32 %v1194, %v1209
    %v1211 = vadd.f32 %v1210, 0.112945676
    %v1212 = vmul.f32 %v1194, %v1211
    %v1213 = vadd.f32 %v1212, 0.4994258
    %v1214 = vmul.f32 %v1194, %v1213
    %v1215 = vadd.f32 %v1214, 1.0
    %v1216 = vrcp.pop %v1215
    %v1217 = vmul.f32 %v1215, %v1216
    %v1218 = vsub.f32 1.0, %v1217
    %v1219 = vmul.f32 %v1216, %v1218
    %v1220 = vadd.f32 %v1216, %v1219
    %vm1221 = vweird.f32 %v1215
    %vm1222 = vweird.f32 %v1216
    %vm1223 = vmor %vm1221, %vm1222
    %v1224 = vsel %vm1223, %v1216, %v1220
    %v1225 = vand.u32 2147483647, %v1215
    %vm1226 = vcmp.eq.f32.partialorder %v1225, 8.507059e+37
    %v1227 = vand.u32 %v1215, 2147483648
    %v1228 = vor.u32 1.1754944e-38, %v1227
    %v1229 = vsel %vm1226, %v1228, %v1224
    %v1230 = vmul.f32 %v1205, %v1229
    %v1231 = vmin.f32 %v1230, 1.0
    %v1232 = vmax.f32 %v1231, -1.0
    %v1233 = vmul.f32 %v1178, %v1178
    %v1234 = vmin.f32 16.0, %v1233
    %v1235 = vmul.f32 %v1234, 2.1237322e-06
    %v1236 = vadd.f32 %v1235, 0.00028619796
    %v1237 = vmul.f32 %v1234, %v1236
    %v1238 = vadd.f32 %v1237, 0.0036580483
    %v1239 = vmul.f32 %v1234, %v1238
    %v1240 = vadd.f32 %v1239, 0.05243302
    %v1241 = vmul.f32 %v1234, %v1240
    %v1242 = vadd.f32 %v1241, 0.18741608
    %v1243 = vmul.f32 %v1234, %v1242
    %v1244 = vadd.f32 %v1243, 1.1283791
    %v1245 = vmul.f32 %v1178, %v1244
    %v1246 = vmul.f32 %v1234, 3.8918573e-05
    %v1247 = vadd.f32 %v1246, 0.001143296
    %v1248 = vmul.f32 %v1234, %v1247
    %v1249 = vadd.f32 %v1248, 0.014752088
    %v1250 = vmul.f32 %v1234, %v1249
    %v1251 = vadd.f32 %v1250, 0.112945676
    %v1252 = vmul.f32 %v1234, %v1251
    %v1253 = vadd.f32 %v1252, 0.4994258
    %v1254 = vmul.f32 %v1234, %v1253
    %v1255 = vadd.f32 %v1254, 1.0
    %v1256 = vrcp.pop %v1255
    %v1257 = vmul.f32 %v1255, %v1256
    %v1258 = vsub.f32 1.0, %v1257
    %v1259 = vmul.f32 %v1256, %v1258
    %v1260 = vadd.f32 %v1256, %v1259
    %vm1261 = vweird.f32 %v1255
    %vm1262 = vweird.f32 %v1256
    %vm1263 = vmor %vm1261, %vm1262
    %v1264 = vsel %vm1263, %v1256, %v1260
    %v1265 = vand.u32 2147483647, %v1255
    %vm1266 = vcmp.eq.f32.partialorder %v1265, 8.507059e+37
    %v1267 = vand.u32 %v1255, 2147483648
    %v1268 = vor.u32 1.1754944e-38, %v1267
    %v1269 = vsel %vm1266, %v1268, %v1264
    %v1270 = vmul.f32 %v1245, %v1269
    %v1271 = vmin.f32 %v1270, 1.0
    %v1272 = vmax.f32 %v1271, -1.0
    %v1273 = vmul.f32 %v1179, %v1179
    %v1274 = vmin.f32 16.0, %v1273
    %v1275 = vmul.f32 %v1274, 2.1237322e-06
    %v1276 = vadd.f32 %v1275, 0.00028619796
    %v1277 = vmul.f32 %v1274, %v1276
    %v1278 = vadd.f32 %v1277, 0.0036580483
    %v1279 = vmul.f32 %v1274, %v1278
    %v1280 = vadd.f32 %v1279, 0.05243302
    %v1281 = vmul.f32 %v1274, %v1280
    %v1282 = vadd.f32 %v1281, 0.18741608
    %v1283 = vmul.f32 %v1274, %v1282
    %v1284 = vadd.f32 %v1283, 1.1283791
    %v1285 = vmul.f32 %v1179, %v1284
    %v1286 = vmul.f32 %v1274, 3.8918573e-05
    %v1287 = vadd.f32 %v1286, 0.001143296
    %v1288 = vmul.f32 %v1274, %v1287
    %v1289 = vadd.f32 %v1288, 0.014752088
    %v1290 = vmul.f32 %v1274, %v1289
    %v1291 = vadd.f32 %v1290, 0.112945676
    %v1292 = vmul.f32 %v1274, %v1291
    %v1293 = vadd.f32 %v1292, 0.4994258
    %v1294 = vmul.f32 %v1274, %v1293
    %v1295 = vadd.f32 %v1294, 1.0
    %v1296 = vrcp.pop %v1295
    %v1297 = vmul.f32 %v1295, %v1296
    %v1298 = vsub.f32 1.0, %v1297
    %v1299 = vmul.f32 %v1296, %v1298
    %v1300 = vadd.f32 %v1296, %v1299
    %vm1301 = vweird.f32 %v1295
    %vm1302 = vweird.f32 %v1296
    %vm1303 = vmor %vm1301, %vm1302
    %v1304 = vsel %vm1303, %v1296, %v1300
    %v1305 = vand.u32 2147483647, %v1295
    %vm1306 = vcmp.eq.f32.partialorder %v1305, 8.507059e+37
    %v1307 = vand.u32 %v1295, 2147483648
    %v1308 = vor.u32 1.1754944e-38, %v1307
    %v1309 = vsel %vm1306, %v1308, %v1304
    %v1310 = vmul.f32 %v1285, %v1309
    %v1311 = vmin.f32 %v1310, 1.0
    %v1312 = vmax.f32 %v1311, -1.0
    %v1313 = vmul.f32 %v1180, %v1180
    %v1314 = vmin.f32 16.0, %v1313
    %v1315 = vmul.f32 %v1314, 2.1237322e-06
    %v1316 = vadd.f32 %v1315, 0.00028619796
    %v1317 = vmul.f32 %v1314, %v1316
    %v1318 = vadd.f32 %v1317, 0.0036580483
    %v1319 = vmul.f32 %v1314, %v1318
    %v1320 = vadd.f32 %v1319, 0.05243302
    %v1321 = vmul.f32 %v1314, %v1320
    %v1322 = vadd.f32 %v1321, 0.18741608
    %v1323 = vmul.f32 %v1314, %v1322
    %v1324 = vadd.f32 %v1323, 1.1283791
    %v1325 = vmul.f32 %v1180, %v1324
    %v1326 = vmul.f32 %v1314, 3.8918573e-05
    %v1327 = vadd.f32 %v1326, 0.001143296
    %v1328 = vmul.f32 %v1314, %v1327
    %v1329 = vadd.f32 %v1328, 0.014752088
    %v1330 = vmul.f32 %v1314, %v1329
    %v1331 = vadd.f32 %v1330, 0.112945676
    %v1332 = vmul.f32 %v1314, %v1331
    %v1333 = vadd.f32 %v1332, 0.4994258
    %v1334 = vmul.f32 %v1314, %v1333
    %v1335 = vadd.f32 %v1334, 1.0
    %v1336 = vrcp.pop %v1335
    %v1337 = vmul.f32 %v1335, %v1336
    %v1338 = vsub.f32 1.0, %v1337
    %v1339 = vmul.f32 %v1336, %v1338
    %v1340 = vadd.f32 %v1336, %v1339
    %vm1341 = vweird.f32 %v1335
    %vm1342 = vweird.f32 %v1336
    %vm1343 = vmor %vm1341, %vm1342
    %v1344 = vsel %vm1343, %v1336, %v1340
    %v1345 = vand.u32 2147483647, %v1335
    %vm1346 = vcmp.eq.f32.partialorder %v1345, 8.507059e+37
    %v1347 = vand.u32 %v1335, 2147483648
    %v1348 = vor.u32 1.1754944e-38, %v1347
    %v1349 = vsel %vm1346, %v1348, %v1344
    %v1350 = vmul.f32 %v1325, %v1349
    %v1351 = vmin.f32 %v1350, 1.0
    %v1352 = vmax.f32 %v1351, -1.0
    %v1353 = vmul.f32 %v1181, %v1181
    %v1354 = vmin.f32 16.0, %v1353
    %v1355 = vmul.f32 %v1354, 2.1237322e-06
    %v1356 = vadd.f32 %v1355, 0.00028619796
    %v1357 = vmul.f32 %v1354, %v1356
    %v1358 = vadd.f32 %v1357, 0.0036580483
    %v1359 = vmul.f32 %v1354, %v1358
    %v1360 = vadd.f32 %v1359, 0.05243302
    %v1361 = vmul.f32 %v1354, %v1360
    %v1362 = vadd.f32 %v1361, 0.18741608
    %v1363 = vmul.f32 %v1354, %v1362
    %v1364 = vadd.f32 %v1363, 1.1283791
    %v1365 = vmul.f32 %v1181, %v1364
    %v1366 = vmul.f32 %v1354, 3.8918573e-05
    %v1367 = vadd.f32 %v1366, 0.001143296
    %v1368 = vmul.f32 %v1354, %v1367
    %v1369 = vadd.f32 %v1368, 0.014752088
    %v1370 = vmul.f32 %v1354, %v1369
    %v1371 = vadd.f32 %v1370, 0.112945676
    %v1372 = vmul.f32 %v1354, %v1371
    %v1373 = vadd.f32 %v1372, 0.4994258
    %v1374 = vmul.f32 %v1354, %v1373
    %v1375 = vadd.f32 %v1374, 1.0
    %v1376 = vrcp.pop %v1375
    %v1377 = vmul.f32 %v1375, %v1376
    %v1378 = vsub.f32 1.0, %v1377
    %v1379 = vmul.f32 %v1376, %v1378
    %v1380 = vadd.f32 %v1376, %v1379
    %vm1381 = vweird.f32 %v1375
    %vm1382 = vweird.f32 %v1376
    %vm1383 = vmor %vm1381, %vm1382
    %v1384 = vsel %vm1383, %v1376, %v1380
    %v1385 = vand.u32 2147483647, %v1375
    %vm1386 = vcmp.eq.f32.partialorder %v1385, 8.507059e+37
    %v1387 = vand.u32 %v1375, 2147483648
    %v1388 = vor.u32 1.1754944e-38, %v1387
    %v1389 = vsel %vm1386, %v1388, %v1384
    %v1390 = vmul.f32 %v1365, %v1389
    %v1391 = vmin.f32 %v1390, 1.0
    %v1392 = vmax.f32 %v1391, -1.0
    %v1393 = vmul.f32 %v1182, %v1182
    %v1394 = vmin.f32 16.0, %v1393
    %v1395 = vmul.f32 %v1394, 2.1237322e-06
    %v1396 = vadd.f32 %v1395, 0.00028619796
    %v1397 = vmul.f32 %v1394, %v1396
    %v1398 = vadd.f32 %v1397, 0.0036580483
    %v1399 = vmul.f32 %v1394, %v1398
    %v1400 = vadd.f32 %v1399, 0.05243302
    %v1401 = vmul.f32 %v1394, %v1400
    %v1402 = vadd.f32 %v1401, 0.18741608
    %v1403 = vmul.f32 %v1394, %v1402
    %v1404 = vadd.f32 %v1403, 1.1283791
    %v1405 = vmul.f32 %v1182, %v1404
    %v1406 = vmul.f32 %v1394, 3.8918573e-05
    %v1407 = vadd.f32 %v1406, 0.001143296
    %v1408 = vmul.f32 %v1394, %v1407
    %v1409 = vadd.f32 %v1408, 0.014752088
    %v1410 = vmul.f32 %v1394, %v1409
    %v1411 = vadd.f32 %v1410, 0.112945676
    %v1412 = vmul.f32 %v1394, %v1411
    %v1413 = vadd.f32 %v1412, 0.4994258
    %v1414 = vmul.f32 %v1394, %v1413
    %v1415 = vadd.f32 %v1414, 1.0
    %v1416 = vrcp.pop %v1415
    %v1417 = vmul.f32 %v1415, %v1416
    %v1418 = vsub.f32 1.0, %v1417
    %v1419 = vmul.f32 %v1416, %v1418
    %v1420 = vadd.f32 %v1416, %v1419
    %vm1421 = vweird.f32 %v1415
    %vm1422 = vweird.f32 %v1416
    %vm1423 = vmor %vm1421, %vm1422
    %v1424 = vsel %vm1423, %v1416, %v1420
    %v1425 = vand.u32 2147483647, %v1415
    %vm1426 = vcmp.eq.f32.partialorder %v1425, 8.507059e+37
    %v1427 = vand.u32 %v1415, 2147483648
    %v1428 = vor.u32 1.1754944e-38, %v1427
    %v1429 = vsel %vm1426, %v1428, %v1424
    %v1430 = vmul.f32 %v1405, %v1429
    %v1431 = vmin.f32 %v1430, 1.0
    %v1432 = vmax.f32 %v1431, -1.0
    %v1433 = vmul.f32 %v1183, %v1183
    %v1434 = vmin.f32 16.0, %v1433
    %v1435 = vmul.f32 %v1434, 2.1237322e-06
    %v1436 = vadd.f32 %v1435, 0.00028619796
    %v1437 = vmul.f32 %v1434, %v1436
    %v1438 = vadd.f32 %v1437, 0.0036580483
    %v1439 = vmul.f32 %v1434, %v1438
    %v1440 = vadd.f32 %v1439, 0.05243302
    %v1441 = vmul.f32 %v1434, %v1440
    %v1442 = vadd.f32 %v1441, 0.18741608
    %v1443 = vmul.f32 %v1434, %v1442
    %v1444 = vadd.f32 %v1443, 1.1283791
    %v1445 = vmul.f32 %v1183, %v1444
    %v1446 = vmul.f32 %v1434, 3.8918573e-05
    %v1447 = vadd.f32 %v1446, 0.001143296
    %v1448 = vmul.f32 %v1434, %v1447
    %v1449 = vadd.f32 %v1448, 0.014752088
    %v1450 = vmul.f32 %v1434, %v1449
    %v1451 = vadd.f32 %v1450, 0.112945676
    %v1452 = vmul.f32 %v1434, %v1451
    %v1453 = vadd.f32 %v1452, 0.4994258
    %v1454 = vmul.f32 %v1434, %v1453
    %v1455 = vadd.f32 %v1454, 1.0
    %v1456 = vrcp.pop %v1455
    %v1457 = vmul.f32 %v1455, %v1456
    %v1458 = vsub.f32 1.0, %v1457
    %v1459 = vmul.f32 %v1456, %v1458
    %v1460 = vadd.f32 %v1456, %v1459
    %vm1461 = vweird.f32 %v1455
    %vm1462 = vweird.f32 %v1456
    %vm1463 = vmor %vm1461, %vm1462
    %v1464 = vsel %vm1463, %v1456, %v1460
    %v1465 = vand.u32 2147483647, %v1455
    %vm1466 = vcmp.eq.f32.partialorder %v1465, 8.507059e+37
    %v1467 = vand.u32 %v1455, 2147483648
    %v1468 = vor.u32 1.1754944e-38, %v1467
    %v1469 = vsel %vm1466, %v1468, %v1464
    %v1470 = vmul.f32 %v1445, %v1469
    %v1471 = vmin.f32 %v1470, 1.0
    %v1472 = vmax.f32 %v1471, -1.0
    %v1473 = vmul.f32 %v1184, %v1184
    %v1474 = vmin.f32 16.0, %v1473
    %v1475 = vmul.f32 %v1474, 2.1237322e-06
    %v1476 = vadd.f32 %v1475, 0.00028619796
    %v1477 = vmul.f32 %v1474, %v1476
    %v1478 = vadd.f32 %v1477, 0.0036580483
    %v1479 = vmul.f32 %v1474, %v1478
    %v1480 = vadd.f32 %v1479, 0.05243302
    %v1481 = vmul.f32 %v1474, %v1480
    %v1482 = vadd.f32 %v1481, 0.18741608
    %v1483 = vmul.f32 %v1474, %v1482
    %v1484 = vadd.f32 %v1483, 1.1283791
    %v1485 = vmul.f32 %v1184, %v1484
    %v1486 = vmul.f32 %v1474, 3.8918573e-05
    %v1487 = vadd.f32 %v1486, 0.001143296
    %v1488 = vmul.f32 %v1474, %v1487
    %v1489 = vadd.f32 %v1488, 0.014752088
    %v1490 = vmul.f32 %v1474, %v1489
    %v1491 = vadd.f32 %v1490, 0.112945676
    %v1492 = vmul.f32 %v1474, %v1491
    %v1493 = vadd.f32 %v1492, 0.4994258
    %v1494 = vmul.f32 %v1474, %v1493
    %v1495 = vadd.f32 %v1494, 1.0
    %v1496 = vrcp.pop %v1495
    %v1497 = vmul.f32 %v1495, %v1496
    %v1498 = vsub.f32 1.0, %v1497
    %v1499 = vmul.f32 %v1496, %v1498
    %v1500 = vadd.f32 %v1496, %v1499
    %vm1501 = vweird.f32 %v1495
    %vm1502 = vweird.f32 %v1496
    %vm1503 = vmor %vm1501, %vm1502
    %v1504 = vsel %vm1503, %v1496, %v1500
    %v1505 = vand.u32 2147483647, %v1495
    %vm1506 = vcmp.eq.f32.partialorder %v1505, 8.507059e+37
    %v1507 = vand.u32 %v1495, 2147483648
    %v1508 = vor.u32 1.1754944e-38, %v1507
    %v1509 = vsel %vm1506, %v1508, %v1504
    %v1510 = vmul.f32 %v1485, %v1509
    %v1511 = vmin.f32 %v1510, 1.0
    %v1512 = vmax.f32 %v1511, -1.0
    %v1513 = vmul.f32 %v1185, %v1185
    %v1514 = vmin.f32 16.0, %v1513
    %v1515 = vmul.f32 %v1514, 2.1237322e-06
    %v1516 = vadd.f32 %v1515, 0.00028619796
    %v1517 = vmul.f32 %v1514, %v1516
    %v1518 = vadd.f32 %v1517, 0.0036580483
    %v1519 = vmul.f32 %v1514, %v1518
    %v1520 = vadd.f32 %v1519, 0.05243302
    %v1521 = vmul.f32 %v1514, %v1520
    %v1522 = vadd.f32 %v1521, 0.18741608
    %v1523 = vmul.f32 %v1514, %v1522
    %v1524 = vadd.f32 %v1523, 1.1283791
    %v1525 = vmul.f32 %v1185, %v1524
    %v1526 = vmul.f32 %v1514, 3.8918573e-05
    %v1527 = vadd.f32 %v1526, 0.001143296
    %v1528 = vmul.f32 %v1514, %v1527
    %v1529 = vadd.f32 %v1528, 0.014752088
    %v1530 = vmul.f32 %v1514, %v1529
    %v1531 = vadd.f32 %v1530, 0.112945676
    %v1532 = vmul.f32 %v1514, %v1531
    %v1533 = vadd.f32 %v1532, 0.4994258
    %v1534 = vmul.f32 %v1514, %v1533
    %v1535 = vadd.f32 %v1534, 1.0
    %v1536 = vrcp.pop %v1535
    %v1537 = vmul.f32 %v1535, %v1536
    %v1538 = vsub.f32 1.0, %v1537
    %v1539 = vmul.f32 %v1536, %v1538
    %v1540 = vadd.f32 %v1536, %v1539
    %vm1541 = vweird.f32 %v1535
    %vm1542 = vweird.f32 %v1536
    %vm1543 = vmor %vm1541, %vm1542
    %v1544 = vsel %vm1543, %v1536, %v1540
    %v1545 = vand.u32 2147483647, %v1535
    %vm1546 = vcmp.eq.f32.partialorder %v1545, 8.507059e+37
    %v1547 = vand.u32 %v1535, 2147483648
    %v1548 = vor.u32 1.1754944e-38, %v1547
    %v1549 = vsel %vm1546, %v1548, %v1544
    %v1550 = vmul.f32 %v1525, %v1549
    %v1551 = vmin.f32 %v1550, 1.0
    %v1552 = vmax.f32 %v1551, -1.0
    %v1553 = vmul.f32 %v1186, %v1186
    %v1554 = vmin.f32 16.0, %v1553
    %v1555 = vmul.f32 %v1554, 2.1237322e-06
    %v1556 = vadd.f32 %v1555, 0.00028619796
    %v1557 = vmul.f32 %v1554, %v1556
    %v1558 = vadd.f32 %v1557, 0.0036580483
    %v1559 = vmul.f32 %v1554, %v1558
    %v1560 = vadd.f32 %v1559, 0.05243302
    %v1561 = vmul.f32 %v1554, %v1560
    %v1562 = vadd.f32 %v1561, 0.18741608
    %v1563 = vmul.f32 %v1554, %v1562
    %v1564 = vadd.f32 %v1563, 1.1283791
    %v1565 = vmul.f32 %v1186, %v1564
    %v1566 = vmul.f32 %v1554, 3.8918573e-05
    %v1567 = vadd.f32 %v1566, 0.001143296
    %v1568 = vmul.f32 %v1554, %v1567
    %v1569 = vadd.f32 %v1568, 0.014752088
    %v1570 = vmul.f32 %v1554, %v1569
    %v1571 = vadd.f32 %v1570, 0.112945676
    %v1572 = vmul.f32 %v1554, %v1571
    %v1573 = vadd.f32 %v1572, 0.4994258
    %v1574 = vmul.f32 %v1554, %v1573
    %v1575 = vadd.f32 %v1574, 1.0
    %v1576 = vrcp.pop %v1575
    %v1577 = vmul.f32 %v1575, %v1576
    %v1578 = vsub.f32 1.0, %v1577
    %v1579 = vmul.f32 %v1576, %v1578
    %v1580 = vadd.f32 %v1576, %v1579
    %vm1581 = vweird.f32 %v1575
    %vm1582 = vweird.f32 %v1576
    %vm1583 = vmor %vm1581, %vm1582
    %v1584 = vsel %vm1583, %v1576, %v1580
    %v1585 = vand.u32 2147483647, %v1575
    %vm1586 = vcmp.eq.f32.partialorder %v1585, 8.507059e+37
    %v1587 = vand.u32 %v1575, 2147483648
    %v1588 = vor.u32 1.1754944e-38, %v1587
    %v1589 = vsel %vm1586, %v1588, %v1584
    %v1590 = vmul.f32 %v1565, %v1589
    %v1591 = vmin.f32 %v1590, 1.0
    %v1592 = vmax.f32 %v1591, -1.0
    %v1593 = vmul.f32 %v1187, %v1187
    %v1594 = vmin.f32 16.0, %v1593
    %v1595 = vmul.f32 %v1594, 2.1237322e-06
    %v1596 = vadd.f32 %v1595, 0.00028619796
    %v1597 = vmul.f32 %v1594, %v1596
    %v1598 = vadd.f32 %v1597, 0.0036580483
    %v1599 = vmul.f32 %v1594, %v1598
    %v1600 = vadd.f32 %v1599, 0.05243302
    %v1601 = vmul.f32 %v1594, %v1600
    %v1602 = vadd.f32 %v1601, 0.18741608
    %v1603 = vmul.f32 %v1594, %v1602
    %v1604 = vadd.f32 %v1603, 1.1283791
    %v1605 = vmul.f32 %v1187, %v1604
    %v1606 = vmul.f32 %v1594, 3.8918573e-05
    %v1607 = vadd.f32 %v1606, 0.001143296
    %v1608 = vmul.f32 %v1594, %v1607
    %v1609 = vadd.f32 %v1608, 0.014752088
    %v1610 = vmul.f32 %v1594, %v1609
    %v1611 = vadd.f32 %v1610, 0.112945676
    %v1612 = vmul.f32 %v1594, %v1611
    %v1613 = vadd.f32 %v1612, 0.4994258
    %v1614 = vmul.f32 %v1594, %v1613
    %v1615 = vadd.f32 %v1614, 1.0
    %v1616 = vrcp.pop %v1615
    %v1617 = vmul.f32 %v1615, %v1616
    %v1618 = vsub.f32 1.0, %v1617
    %v1619 = vmul.f32 %v1616, %v1618
    %v1620 = vadd.f32 %v1616, %v1619
    %vm1621 = vweird.f32 %v1615
    %vm1622 = vweird.f32 %v1616
    %vm1623 = vmor %vm1621, %vm1622
    %v1624 = vsel %vm1623, %v1616, %v1620
    %v1625 = vand.u32 2147483647, %v1615
    %vm1626 = vcmp.eq.f32.partialorder %v1625, 8.507059e+37
    %v1627 = vand.u32 %v1615, 2147483648
    %v1628 = vor.u32 1.1754944e-38, %v1627
    %v1629 = vsel %vm1626, %v1628, %v1624
    %v1630 = vmul.f32 %v1605, %v1629
    %v1631 = vmin.f32 %v1630, 1.0
    %v1632 = vmax.f32 %v1631, -1.0
    %v1633 = vmul.f32 %v1188, %v1188
    %v1634 = vmin.f32 16.0, %v1633
    %v1635 = vmul.f32 %v1634, 2.1237322e-06
    %v1636 = vadd.f32 %v1635, 0.00028619796
    %v1637 = vmul.f32 %v1634, %v1636
    %v1638 = vadd.f32 %v1637, 0.0036580483
    %v1639 = vmul.f32 %v1634, %v1638
    %v1640 = vadd.f32 %v1639, 0.05243302
    %v1641 = vmul.f32 %v1634, %v1640
    %v1642 = vadd.f32 %v1641, 0.18741608
    %v1643 = vmul.f32 %v1634, %v1642
    %v1644 = vadd.f32 %v1643, 1.1283791
    %v1645 = vmul.f32 %v1188, %v1644
    %v1646 = vmul.f32 %v1634, 3.8918573e-05
    %v1647 = vadd.f32 %v1646, 0.001143296
    %v1648 = vmul.f32 %v1634, %v1647
    %v1649 = vadd.f32 %v1648, 0.014752088
    %v1650 = vmul.f32 %v1634, %v1649
    %v1651 = vadd.f32 %v1650, 0.112945676
    %v1652 = vmul.f32 %v1634, %v1651
    %v1653 = vadd.f32 %v1652, 0.4994258
    %v1654 = vmul.f32 %v1634, %v1653
    %v1655 = vadd.f32 %v1654, 1.0
    %v1656 = vrcp.pop %v1655
    %v1657 = vmul.f32 %v1655, %v1656
    %v1658 = vsub.f32 1.0, %v1657
    %v1659 = vmul.f32 %v1656, %v1658
    %v1660 = vadd.f32 %v1656, %v1659
    %vm1661 = vweird.f32 %v1655
    %vm1662 = vweird.f32 %v1656
    %vm1663 = vmor %vm1661, %vm1662
    %v1664 = vsel %vm1663, %v1656, %v1660
    %v1665 = vand.u32 2147483647, %v1655
    %vm1666 = vcmp.eq.f32.partialorder %v1665, 8.507059e+37
    %v1667 = vand.u32 %v1655, 2147483648
    %v1668 = vor.u32 1.1754944e-38, %v1667
    %v1669 = vsel %vm1666, %v1668, %v1664
    %v1670 = vmul.f32 %v1645, %v1669
    %v1671 = vmin.f32 %v1670, 1.0
    %v1672 = vmax.f32 %v1671, -1.0
    %v1673 = vmul.f32 %v1189, %v1189
    %v1674 = vmin.f32 16.0, %v1673
    %v1675 = vmul.f32 %v1674, 2.1237322e-06
    %v1676 = vadd.f32 %v1675, 0.00028619796
    %v1677 = vmul.f32 %v1674, %v1676
    %v1678 = vadd.f32 %v1677, 0.0036580483
    %v1679 = vmul.f32 %v1674, %v1678
    %v1680 = vadd.f32 %v1679, 0.05243302
    %v1681 = vmul.f32 %v1674, %v1680
    %v1682 = vadd.f32 %v1681, 0.18741608
    %v1683 = vmul.f32 %v1674, %v1682
    %v1684 = vadd.f32 %v1683, 1.1283791
    %v1685 = vmul.f32 %v1189, %v1684
    %v1686 = vmul.f32 %v1674, 3.8918573e-05
    %v1687 = vadd.f32 %v1686, 0.001143296
    %v1688 = vmul.f32 %v1674, %v1687
    %v1689 = vadd.f32 %v1688, 0.014752088
    %v1690 = vmul.f32 %v1674, %v1689
    %v1691 = vadd.f32 %v1690, 0.112945676
    %v1692 = vmul.f32 %v1674, %v1691
    %v1693 = vadd.f32 %v1692, 0.4994258
    %v1694 = vmul.f32 %v1674, %v1693
    %v1695 = vadd.f32 %v1694, 1.0
    %v1696 = vrcp.pop %v1695
    %v1697 = vmul.f32 %v1695, %v1696
    %v1698 = vsub.f32 1.0, %v1697
    %v1699 = vmul.f32 %v1696, %v1698
    %v1700 = vadd.f32 %v1696, %v1699
    %vm1701 = vweird.f32 %v1695
    %vm1702 = vweird.f32 %v1696
    %vm1703 = vmor %vm1701, %vm1702
    %v1704 = vsel %vm1703, %v1696, %v1700
    %v1705 = vand.u32 2147483647, %v1695
    %vm1706 = vcmp.eq.f32.partialorder %v1705, 8.507059e+37
    %v1707 = vand.u32 %v1695, 2147483648
    %v1708 = vor.u32 1.1754944e-38, %v1707
    %v1709 = vsel %vm1706, %v1708, %v1704
    %v1710 = vmul.f32 %v1685, %v1709
    %v1711 = vmin.f32 %v1710, 1.0
    %v1712 = vmax.f32 %v1711, -1.0
    %v1713 = vmul.f32 %v1190, %v1190
    %v1714 = vmin.f32 16.0, %v1713
    %v1715 = vmul.f32 %v1714, 2.1237322e-06
    %v1716 = vadd.f32 %v1715, 0.00028619796
    %v1717 = vmul.f32 %v1714, %v1716
    %v1718 = vadd.f32 %v1717, 0.0036580483
    %v1719 = vmul.f32 %v1714, %v1718
    %v1720 = vadd.f32 %v1719, 0.05243302
    %v1721 = vmul.f32 %v1714, %v1720
    %v1722 = vadd.f32 %v1721, 0.18741608
    %v1723 = vmul.f32 %v1714, %v1722
    %v1724 = vadd.f32 %v1723, 1.1283791
    %v1725 = vmul.f32 %v1190, %v1724
    %v1726 = vmul.f32 %v1714, 3.8918573e-05
    %v1727 = vadd.f32 %v1726, 0.001143296
    %v1728 = vmul.f32 %v1714, %v1727
    %v1729 = vadd.f32 %v1728, 0.014752088
    %v1730 = vmul.f32 %v1714, %v1729
    %v1731 = vadd.f32 %v1730, 0.112945676
    %v1732 = vmul.f32 %v1714, %v1731
    %v1733 = vadd.f32 %v1732, 0.4994258
    %v1734 = vmul.f32 %v1714, %v1733
    %v1735 = vadd.f32 %v1734, 1.0
    %v1736 = vrcp.pop %v1735
    %v1737 = vmul.f32 %v1735, %v1736
    %v1738 = vsub.f32 1.0, %v1737
    %v1739 = vmul.f32 %v1736, %v1738
    %v1740 = vadd.f32 %v1736, %v1739
    %vm1741 = vweird.f32 %v1735
    %vm1742 = vweird.f32 %v1736
    %vm1743 = vmor %vm1741, %vm1742
    %v1744 = vsel %vm1743, %v1736, %v1740
    %v1745 = vand.u32 2147483647, %v1735
    %vm1746 = vcmp.eq.f32.partialorder %v1745, 8.507059e+37
    %v1747 = vand.u32 %v1735, 2147483648
    %v1748 = vor.u32 1.1754944e-38, %v1747
    %v1749 = vsel %vm1746, %v1748, %v1744
    %v1750 = vmul.f32 %v1725, %v1749
    %v1751 = vmin.f32 %v1750, 1.0
    %v1752 = vmax.f32 %v1751, -1.0
    %v1753 = vmul.f32 %v1191, %v1191
    %v1754 = vmin.f32 16.0, %v1753
    %v1755 = vmul.f32 %v1754, 2.1237322e-06
    %v1756 = vadd.f32 %v1755, 0.00028619796
    %v1757 = vmul.f32 %v1754, %v1756
    %v1758 = vadd.f32 %v1757, 0.0036580483
    %v1759 = vmul.f32 %v1754, %v1758
    %v1760 = vadd.f32 %v1759, 0.05243302
    %v1761 = vmul.f32 %v1754, %v1760
    %v1762 = vadd.f32 %v1761, 0.18741608
    %v1763 = vmul.f32 %v1754, %v1762
    %v1764 = vadd.f32 %v1763, 1.1283791
    %v1765 = vmul.f32 %v1191, %v1764
    %v1766 = vmul.f32 %v1754, 3.8918573e-05
    %v1767 = vadd.f32 %v1766, 0.001143296
    %v1768 = vmul.f32 %v1754, %v1767
    %v1769 = vadd.f32 %v1768, 0.014752088
    %v1770 = vmul.f32 %v1754, %v1769
    %v1771 = vadd.f32 %v1770, 0.112945676
    %v1772 = vmul.f32 %v1754, %v1771
    %v1773 = vadd.f32 %v1772, 0.4994258
    %v1774 = vmul.f32 %v1754, %v1773
    %v1775 = vadd.f32 %v1774, 1.0
    %v1776 = vrcp.pop %v1775
    %v1777 = vmul.f32 %v1775, %v1776
    %v1778 = vsub.f32 1.0, %v1777
    %v1779 = vmul.f32 %v1776, %v1778
    %v1780 = vadd.f32 %v1776, %v1779
    %vm1781 = vweird.f32 %v1775
    %vm1782 = vweird.f32 %v1776
    %vm1783 = vmor %vm1781, %vm1782
    %v1784 = vsel %vm1783, %v1776, %v1780
    %v1785 = vand.u32 2147483647, %v1775
    %vm1786 = vcmp.eq.f32.partialorder %v1785, 8.507059e+37
    %v1787 = vand.u32 %v1775, 2147483648
    %v1788 = vor.u32 1.1754944e-38, %v1787
    %v1789 = vsel %vm1786, %v1788, %v1784
    %v1790 = vmul.f32 %v1765, %v1789
    %v1791 = vmin.f32 %v1790, 1.0
    %v1792 = vmax.f32 %v1791, -1.0
    %v1793 = vmul.f32 %v1192, %v1192
    %v1794 = vmin.f32 16.0, %v1793
    %v1795 = vmul.f32 %v1794, 2.1237322e-06
    %v1796 = vadd.f32 %v1795, 0.00028619796
    %v1797 = vmul.f32 %v1794, %v1796
    %v1798 = vadd.f32 %v1797, 0.0036580483
    %v1799 = vmul.f32 %v1794, %v1798
    %v1800 = vadd.f32 %v1799, 0.05243302
    %v1801 = vmul.f32 %v1794, %v1800
    %v1802 = vadd.f32 %v1801, 0.18741608
    %v1803 = vmul.f32 %v1794, %v1802
    %v1804 = vadd.f32 %v1803, 1.1283791
    %v1805 = vmul.f32 %v1192, %v1804
    %v1806 = vmul.f32 %v1794, 3.8918573e-05
    %v1807 = vadd.f32 %v1806, 0.001143296
    %v1808 = vmul.f32 %v1794, %v1807
    %v1809 = vadd.f32 %v1808, 0.014752088
    %v1810 = vmul.f32 %v1794, %v1809
    %v1811 = vadd.f32 %v1810, 0.112945676
    %v1812 = vmul.f32 %v1794, %v1811
    %v1813 = vadd.f32 %v1812, 0.4994258
    %v1814 = vmul.f32 %v1794, %v1813
    %v1815 = vadd.f32 %v1814, 1.0
    %v1816 = vrcp.pop %v1815
    %v1817 = vmul.f32 %v1815, %v1816
    %v1818 = vsub.f32 1.0, %v1817
    %v1819 = vmul.f32 %v1816, %v1818
    %v1820 = vadd.f32 %v1816, %v1819
    %vm1821 = vweird.f32 %v1815
    %vm1822 = vweird.f32 %v1816
    %vm1823 = vmor %vm1821, %vm1822
    %v1824 = vsel %vm1823, %v1816, %v1820
    %v1825 = vand.u32 2147483647, %v1815
    %vm1826 = vcmp.eq.f32.partialorder %v1825, 8.507059e+37
    %v1827 = vand.u32 %v1815, 2147483648
    %v1828 = vor.u32 1.1754944e-38, %v1827
    %v1829 = vsel %vm1826, %v1828, %v1824
    %v1830 = vmul.f32 %v1805, %v1829
    %v1831 = vmin.f32 %v1830, 1.0
    %v1832 = vmax.f32 %v1831, -1.0
    %v1833 = vadd.f32 %v1232, 1.0
    %v1834 = vadd.f32 %v1272, 1.0
    %v1835 = vadd.f32 %v1312, 1.0
    %v1836 = vadd.f32 %v1352, 1.0
    %v1837 = vadd.f32 %v1392, 1.0
    %v1838 = vadd.f32 %v1432, 1.0
    %v1839 = vadd.f32 %v1472, 1.0
    %v1840 = vadd.f32 %v1512, 1.0
    %v1841 = vadd.f32 %v1552, 1.0
    %v1842 = vadd.f32 %v1592, 1.0
    %v1843 = vadd.f32 %v1632, 1.0
    %v1844 = vadd.f32 %v1672, 1.0
    %v1845 = vadd.f32 %v1712, 1.0
    %v1846 = vadd.f32 %v1752, 1.0
    %v1847 = vadd.f32 %v1792, 1.0
    %v1848 = vadd.f32 %v1832, 1.0
    %v1849 = vmul.f32 %v1161, %v1833
    %v1850 = vmul.f32 %v1162, %v1834
    %v1851 = vmul.f32 %v1163, %v1835
    %v1852 = vmul.f32 %v1164, %v1836
    %v1853 = vmul.f32 %v1165, %v1837
    %v1854 = vmul.f32 %v1166, %v1838
    %v1855 = vmul.f32 %v1167, %v1839
    %v1856 = vmul.f32 %v1168, %v1840
    %v1857 = vmul.f32 %v1169, %v1841
    %v1858 = vmul.f32 %v1170, %v1842
    %v1859 = vmul.f32 %v1171, %v1843
    %v1860 = vmul.f32 %v1172, %v1844
    %v1861 = vmul.f32 %v1173, %v1845
    %v1862 = vmul.f32 %v1174, %v1846
    %v1863 = vmul.f32 %v1175, %v1847
    %v1864 = vmul.f32 %v1176, %v1848
    %v1865 = vld [vmem:[#allocation10] sm:$0xff]
    %1866 = vmatpush.msra.mxu0 %v1864
    %1867 = vmatpush.msra.mxu0 %v1863
    %1868 = vmatpush.msra.mxu0 %v1862
    %1869 = vmatpush.msra.mxu0 %v1861
    %1870 = vmatpush.msra.mxu0 %v1860
    %1871 = vmatpush.msra.mxu0 %v1859
    %1872 = vmatpush.msra.mxu0 %v1858
    %1873 = vmatpush.msra.mxu0 %v1857
    %1874 = vmatpush.msra.mxu0 %v1856
    %1875 = vmatpush.msra.mxu0 %v1855
    %1876 = vmatpush.msra.mxu0 %v1854
    %1877 = vmatpush.msra.mxu0 %v1853
    %1878 = vmatpush.msra.mxu0 %v1852
    %1879 = vmatpush.msra.mxu0 %v1851
    %1880 = vmatpush.msra.mxu0 %v1850
    %1881 = vmatpush.msra.mxu0 %v1849
    %1882 = vmatmul.f32.gmra.mxu0 %v1865
    %v1883 = vpop.f32.mrf.mxu0
    %v1884 = vadd.f32 0.0, %v1883
    %1885 = vdwg.mxu0
    %v1886 = vld [vmem:[#allocation11] sm:$0xff]
    %v1887 = vld [vmem:[#allocation11 + $0x8] sm:$0xff]
    %v1888 = vld [vmem:[#allocation11 + $0x10] sm:$0xff]
    %v1889 = vld [vmem:[#allocation11 + $0x18] sm:$0xff]
    %v1890 = vld [vmem:[#allocation11 + $0x20] sm:$0xff]
    %v1891 = vld [vmem:[#allocation11 + $0x28] sm:$0xff]
    %v1892 = vld [vmem:[#allocation11 + $0x30] sm:$0xff]
    %v1893 = vld [vmem:[#allocation11 + $0x38] sm:$0xff]
    %v1894 = vld [vmem:[#allocation11 + $0x40] sm:$0xff]
    %v1895 = vld [vmem:[#allocation11 + $0x48] sm:$0xff]
    %v1896 = vld [vmem:[#allocation11 + $0x50] sm:$0xff]
    %v1897 = vld [vmem:[#allocation11 + $0x58] sm:$0xff]
    %v1898 = vld [vmem:[#allocation11 + $0x60] sm:$0xff]
    %v1899 = vld [vmem:[#allocation11 + $0x68] sm:$0xff]
    %v1900 = vld [vmem:[#allocation11 + $0x70] sm:$0xff]
    %v1901 = vld [vmem:[#allocation11 + $0x78] sm:$0xff]
    %v1902 = vld [vmem:[%s8] sm:$0x1]
    %v1904 = vperm.slane %v1902, 0
    %1906 = vmatpush.msra.mxu0 %v1901
    %1907 = vmatpush.msra.mxu0 %v1900
    %1908 = vmatpush.msra.mxu0 %v1899
    %1909 = vmatpush.msra.mxu0 %v1898
    %1910 = vmatpush.msra.mxu0 %v1897
    %1911 = vmatpush.msra.mxu0 %v1896
    %1912 = vmatpush.msra.mxu0 %v1895
    %1913 = vmatpush.msra.mxu0 %v1894
    %1914 = vmatpush.msra.mxu0 %v1893
    %1915 = vmatpush.msra.mxu0 %v1892
    %1916 = vmatpush.msra.mxu0 %v1891
    %1917 = vmatpush.msra.mxu0 %v1890
    %1918 = vmatpush.msra.mxu0 %v1889
    %1919 = vmatpush.msra.mxu0 %v1888
    %1920 = vmatpush.msra.mxu0 %v1887
    %1921 = vmatpush.msra.mxu0 %v1886
    %1922 = vmatmul.f32.gmra.mxu0 %v1884
    %v1923 = vpop.f32.mrf.mxu0
    %v1924 = vadd.f32 %v1904, %v1923
    %1925 = vdwg.mxu0
    %1926 = vst [vmem:[#allocation13] sm:$0xff] %v1924
    // Predicated region
    $region62: #{tpu_custom_call.1} parent=1 // pred_check
      _
    $region63: #{tpu_custom_call.1} parent=1 // pred_check_branch
      %1928 = sbr.rel (0) target = $region65
    $region64: #{tpu_custom_call.1} parent=1 // pred_region
      %1930 = vsyncadd [#allocation4], 0
      %s1932 = sshll.u32 [#allocation13], 4
      %s1933 = int_to_ptr.vmem [resolvable:$true] %s1932
      %s1934 = sshll.u32 %s9, 4
      %s1935 = int_to_ptr.hbm [resolvable:$true] %s1934
      %1937 = dma.vmem_to_hbm [thread:$0]  %s1933, 128, %s1935, [#allocation4]
    $region65: #{tpu_custom_call.1} parent=1 // pred_fallthru
      _
    // Predicated region
    $region66: #{tpu_custom_call.1} parent=1 // pred_check
      _
    $region67: #{tpu_custom_call.1} parent=1 // pred_check_branch
      %1939 = sbr.rel (0) target = $region69
    $region68: #{tpu_custom_call.1} parent=1 // pred_region
      %1941 = dma.done [#allocation4], 128
    $region69: #{tpu_custom_call.1} parent=1 // pred_fallthru
      _
    %1942 = vsyncpa [#allocation3], 1
    %1943 = vsyncpa [#allocation6], 1
    %1944 = vsyncpa [#allocation9], 1
    %1945 = vsyncpa [#allocation12], 1
    %1946 = vsyncpa [#allocation4], 1

</llo_original>
